<compile_context>
chip_gen: v7x
topology: tpu7x:2x2x1
jax: 0.10.0
libtpu: 0.0.40
codegen_flags: <defaults>
</compile_context>

<pallas_src>
import functools
import math

import jax
import jax.numpy as jnp
from jax import lax
from jax.experimental import pallas as pl
from jax.experimental.pallas import tpu as pltpu


def _cdiv(a, b):
    return (a + b - 1) // b


def _round_up(a, b):
    return _cdiv(a, b) * b


def _mha_knn_kernel(xpt_ref, xnb_ref, w_pt_ref, w_kv_ref, w_ctx_ref, o_ref,
                    kv_ref, *, E, K, TMI, NCHUNK):
    """One grid step = NCHUNK sub-slabs of TMI points (points on lanes).

    xpt_ref : (NCHUNK, C+1, TMI)     raw point features + trailing ones row
    xnb_ref : (NCHUNK, C+1, K*TMI)   K nearest-neighbour features, k-major
    w_pt_ref: (E+out, C+1)           rows [Wq@We | bq ; Wout@We | Wout@bo]
    w_kv_ref: (2E, C+1)              rows [Wk@We | bk ; Wv@We | bv]
    w_ctx_ref: (out, E)              Wout@Wo
    o_ref   : (NCHUNK, out, TMI)
    kv_ref  : VMEM scratch (2E, K*TMI) f32
    """
    f32 = jnp.float32
    w_pt = w_pt_ref[...]
    w_kv = w_kv_ref[...]
    w_ctx = w_ctx_ref[...]

    # neighbours per projection dot, chosen so each MXU result is <= ~32 vregs.
    KG = max(1, min(K, (32 * 1024) // (2 * E * TMI)))

    def chunk(j, carry):
        # point path: q projection and (residual + output-linear) in one dot.
        pq = jnp.dot(w_pt, xpt_ref[j], preferred_element_type=f32)   # (E+out, TMI)
        q = pq[:E, :]                                                # head_dim==1 -> scale 1
        y_res = pq[E:, :]                                            # Wout@(We@x) + Wout@bo

        # fused k/v projection for all K neighbours of this chunk, done in
        # lane-groups of KG neighbours, stashed in the VMEM scratch.
        for g0 in range(0, K, KG):
            gw = min(KG, K - g0) * TMI
            kv_ref[:, pl.ds(g0 * TMI, gw)] = jnp.dot(
                w_kv, xnb_ref[j, :, pl.ds(g0 * TMI, gw)],
                preferred_element_type=f32)

        # two-pass softmax over the K resident neighbours (no flash rescale).
        m = q * kv_ref[pl.ds(0, E), pl.ds(0, TMI)]
        for k in range(1, K):
            m = jnp.maximum(m, q * kv_ref[pl.ds(0, E), pl.ds(k * TMI, TMI)])
        l = jnp.zeros((E, TMI), f32)
        acc = jnp.zeros((E, TMI), f32)
        for k in range(K):
            kv_k = kv_ref[:, pl.ds(k * TMI, TMI)]                    # (2E, TMI)
            p = jnp.exp(q * kv_k[:E, :] - m)
            l = l + p
            acc = acc + p * kv_k[E:, :]

        ctx = acc * pl.reciprocal(l, approx=True)                    # (E, TMI)
        y = y_res + jnp.dot(w_ctx, ctx, preferred_element_type=f32)  # (out, TMI)
        o_ref[j] = y.astype(o_ref.dtype)
        return carry

    if NCHUNK == 1:
        chunk(0, 0)
    else:
        lax.fori_loop(0, NCHUNK, chunk, 0)


def _knn_idx(x_v, K):
    """K nearest neighbours (incl. self) per point, within each batch.

    |a-b|^2 = |a|^2 + |b|^2 - 2 a.b  -> matmul form (MXU, no (B,N,N,3) temp).
    """
    sq = jnp.sum(x_v * x_v, axis=-1)
    d2 = sq[:, :, None] + sq[:, None, :] - 2.0 * jnp.einsum(
        'bnd,bmd->bnm', x_v, x_v)
    _, idx = lax.top_k(-d2, K)
    return idx


def fold_params(p):
    """Collapse the module's 10 weight/bias tensors into 3 kernel inputs.

    Kernel inputs carry a trailing ones-row, so every bias becomes an extra
    weight column and the kernel body contains no bias adds / broadcasts.
    """
    We, Wq, Wk, Wv, Wo, Wout = p['We'], p['Wq'], p['Wk'], p['Wv'], p['Wo'], p['Wout']
    w_pt = jnp.concatenate([
        jnp.concatenate([Wq @ We, p['bq'][:, None]], axis=1),              # q path
        jnp.concatenate([Wout @ We, (Wout @ p['bo'])[:, None]], axis=1),   # residual+out path
    ], axis=0)                                                             # (E+out, C+1)
    w_kv = jnp.concatenate([
        jnp.concatenate([Wk @ We, p['bk'][:, None]], axis=1),
        jnp.concatenate([Wv @ We, p['bv'][:, None]], axis=1),
    ], axis=0)                                                             # (2E, C+1)
    w_ctx = Wout @ Wo                                                      # (out, E)
    return w_pt, w_kv, w_ctx


def mha_idx_encoder_forward(x, x_v, params, *, K, num_heads,
                            tile_inner=256, max_chunks_per_step=4):
    """x: (B, N, input_dim) features; x_v: (B, N, 3) point coordinates."""
    B, N, C = x.shape
    E = params['We'].shape[0]
    out_dim = params['Wout'].shape[0]
    assert E % num_heads == 0
    assert E // num_heads == 1, "kernel specialised for the default config (head_dim == 1)"
    assert N >= K

    # --- KNN + neighbour gather stay in plain JAX. ---
    # TODO(synk): exact O(N^2) KNN; a tiled in-kernel top-k would be needed for very large N.
    idx = _knn_idx(x_v, K)                                               # (B, N, K), per-batch
    idx = idx + (jnp.arange(B, dtype=idx.dtype) * N)[:, None, None]      # global point index
    P = B * N

    # --- tiling: NCHUNK lane-slabs of TMI points per grid step ---
    LANE = 128
    TMI = max(LANE, min(_round_up(tile_inner, LANE), _round_up(P, LANE)))
    n_need = _cdiv(P, TMI)
    NCHUNK = min(max_chunks_per_step, n_need)
    nsteps = _cdiv(n_need, NCHUNK)
    if nsteps == 1 and NCHUNK > 1:
        NCHUNK = _cdiv(NCHUNK, 2)            # keep >=2 grid steps so v7x dual-TC gets work
        nsteps = _cdiv(n_need, NCHUNK)
    nchunks = nsteps * NCHUNK
    Ppad = nchunks * TMI
    C1 = C + 1

    # --- point slab (chunk, C+1, TMI): features + ones row (bias folding) ---
    x_aug = jnp.concatenate([x.reshape(P, C),
                             jnp.ones((P, 1), x.dtype)], axis=1)          # (P, C+1)
    x_pad = jnp.pad(x_aug, ((0, Ppad - P), (0, 0)))
    xpt = x_pad.reshape(nchunks, TMI, C1).transpose(0, 2, 1)              # tiny (16*P bytes)

    # --- neighbour slab (chunk, C+1, K*TMI): one batched gather straight into
    #     the kernel layout; no post-gather transpose of the 300+ byte/point slab ---
    xsrc = x_aug.T                                                        # (C+1, P), tiny
    idx_pad = jnp.pad(idx.reshape(P, K), ((0, Ppad - P), (0, 0)))         # padded rows -> point 0
    idx_chunks = idx_pad.reshape(nchunks, TMI, K).transpose(0, 2, 1) \
                        .reshape(nchunks, K * TMI)
    xnb = jax.vmap(lambda ids: jnp.take(xsrc, ids, axis=1))(idx_chunks)   # (chunk, C+1, K*TMI)

    w_pt, w_kv, w_ctx = fold_params(params)

    kernel = functools.partial(_mha_knn_kernel, E=E, K=K, TMI=TMI, NCHUNK=NCHUNK)

    y_slab = pl.pallas_call(
        kernel,
        out_shape=jax.ShapeDtypeStruct((nchunks, out_dim, TMI), x.dtype),
        grid_spec=pltpu.PrefetchScalarGridSpec(
            num_scalar_prefetch=0,
            grid=(nsteps,),
            in_specs=[
                pl.BlockSpec((NCHUNK, C1, TMI), lambda i: (i, 0, 0)),       # point features
                pl.BlockSpec((NCHUNK, C1, K * TMI), lambda i: (i, 0, 0)),   # neighbour features
                pl.BlockSpec(w_pt.shape, lambda i: (0, 0)),                 # folded weights
                pl.BlockSpec(w_kv.shape, lambda i: (0, 0)),
                pl.BlockSpec(w_ctx.shape, lambda i: (0, 0)),
            ],
            out_specs=pl.BlockSpec((NCHUNK, out_dim, TMI), lambda i: (i, 0, 0)),
            scratch_shapes=[pltpu.VMEM((2 * E, K * TMI), jnp.float32)],
        ),
        compiler_params=pltpu.CompilerParams(
            dimension_semantics=("parallel",)),                             # megacore-shardable
    )(xpt, xnb, w_pt, w_kv, w_ctx)

    y = y_slab.transpose(0, 2, 1).reshape(Ppad, out_dim)[:P].reshape(B, N, out_dim)
    unpooling_idxs = []      # pooling_factor is None in the default config
    return y, unpooling_idxs


def reference_forward(x, x_v, params, *, K, num_heads):
    """Pure-JAX reference mirroring the PyTorch forward (eval mode, unfused)."""
    B, N, _ = x.shape
    E = params['We'].shape[0]
    H = num_heads
    hd = E // H

    xe = jnp.einsum('bnc,ec->bne', x, params['We'])                         # (B, N, E)
    idx = _knn_idx(x_v, K)
    xnb = jax.vmap(lambda f, i: f[i])(xe, idx)                              # (B, N, K, E)

    q = jnp.einsum('bne,fe->bnf', xe, params['Wq']) + params['bq']
    k = jnp.einsum('bnke,fe->bnkf', xnb, params['Wk']) + params['bk']
    v = jnp.einsum('bnke,fe->bnkf', xnb, params['Wv']) + params['bv']

    qh = q.reshape(B, N, H, hd)
    kh = k.reshape(B, N, K, H, hd)
    vh = v.reshape(B, N, K, H, hd)
    scores = jnp.einsum('bnhd,bnkhd->bnhk', qh, kh) / math.sqrt(hd)
    attn = jax.nn.softmax(scores, axis=-1)
    ctx = jnp.einsum('bnhk,bnkhd->bnhd', attn, vh).reshape(B, N, E)
    out = jnp.einsum('bne,fe->bnf', ctx, params['Wo']) + params['bo']
    res = out + xe                                                          # Residual
    return jnp.einsum('bne,fe->bnf', res, params['Wout'])


def init_params(key, *, input_dim, embed_dim, num_heads, output_dim):
    E = embed_dim
    assert E % num_heads == 0
    ks = jax.random.split(key, 10)
    s = 0.2
    return {
        'We':   jax.random.normal(ks[0], (E, input_dim), jnp.float32) * s,  # embedding (no bias)
        'Wq':   jax.random.normal(ks[1], (E, E), jnp.float32) * s,          # in_proj q
        'Wk':   jax.random.normal(ks[2], (E, E), jnp.float32) * s,          # in_proj k
        'Wv':   jax.random.normal(ks[3], (E, E), jnp.float32) * s,          # in_proj v
        'Wo':   jax.random.normal(ks[4], (E, E), jnp.float32) * s,          # out_proj
        'bq':   jax.random.normal(ks[5], (E,), jnp.float32) * s,
        'bk':   jax.random.normal(ks[6], (E,), jnp.float32) * s,
        'bv':   jax.random.normal(ks[7], (E,), jnp.float32) * s,
        'bo':   jax.random.normal(ks[8], (E,), jnp.float32) * s,
        'Wout': jax.random.normal(ks[9], (output_dim, E), jnp.float32) * s,  # output_0 (no bias)
    }


if __name__ == "__main__":
    # Module defaults: input_dim=3, output_dim=1, K=27, 16 heads, stage width 16.
    input_dim, output_dim = 3, 1
    K_knn, num_heads, embed_dim = 27, 16, 16

    key = jax.random.PRNGKey(0)
    kp, kdata = jax.random.split(key)
    params = init_params(kp, input_dim=input_dim, embed_dim=embed_dim,
                         num_heads=num_heads, output_dim=output_dim)

    # Three shapes: exact single tile (P=128), padded 2-step grid (P=300, TMI=256),
    # and a multi-chunk multi-step grid (P=1600: TMI=256, 4 chunks/step, 2 steps).
    for (B, N) in [(2, 64), (1, 300), (2, 800)]:
        kx, kv_, kdata = jax.random.split(kdata, 3)
        x = jax.random.normal(kx, (B, N, input_dim), jnp.float32)      # point features
        x_v = jax.random.normal(kv_, (B, N, input_dim), jnp.float32)   # point coordinates (KNN)

        y, unpooling_idxs = mha_idx_encoder_forward(
            x, x_v, params, K=K_knn, num_heads=num_heads)
        y = jax.block_until_ready(y)

        assert y.shape == (B, N, output_dim)
        assert unpooling_idxs == []

        y_ref = reference_forward(x, x_v, params, K=K_knn, num_heads=num_heads)
        if not jnp.allclose(y, y_ref, atol=5e-3, rtol=5e-3):
            raise AssertionError(
                f"mismatch vs reference (B={B}, N={N}), "
                f"max abs err = {float(jnp.max(jnp.abs(y - y_ref)))}")

    print("KERNEL_OK")
</pallas_src>

<mosaic_0001>
module attributes {stable_mosaic.version = 11 : i64} {
  func.func @_mha_knn_kernel(%arg0: i32, %arg1: memref<1x4x128xf32, #tpu.memory_space<vmem>>, %arg2: memref<1x4x3456xf32, #tpu.memory_space<vmem>>, %arg3: memref<17x4xf32, #tpu.memory_space<vmem>>, %arg4: memref<32x4xf32, #tpu.memory_space<vmem>>, %arg5: memref<1x16xf32, #tpu.memory_space<vmem>>, %arg6: memref<1x1x128xf32, #tpu.memory_space<vmem>>, %arg7: memref<32x3456xf32, #tpu.memory_space<vmem>>) attributes {dimension_semantics = [#tpu.dimension_semantics<parallel>], iteration_bounds = array<i64: 1>, scalar_prefetch = 0 : i64, scratch_operands = 1 : i64, tpu.core_type = #tpu.core_type<tc>, window_params = [{transform_indices = @transform_0, window_bounds = array<i64: 1, 4, 128>}, {transform_indices = @transform_1, window_bounds = array<i64: 1, 4, 3456>}, {pipeline_mode = #tpu.pipeline_mode<synchronous>, transform_indices = @transform_2, window_bounds = array<i64: 17, 4>}, {pipeline_mode = #tpu.pipeline_mode<synchronous>, transform_indices = @transform_3, window_bounds = array<i64: 32, 4>}, {pipeline_mode = #tpu.pipeline_mode<synchronous>, transform_indices = @transform_4, window_bounds = array<i64: 1, 16>}, {transform_indices = @transform_5, window_bounds = array<i64: 1, 1, 128>}]} {
    %c0 = arith.constant 0 : index
    %c0_0 = arith.constant 0 : index
    %0 = vector.load %arg3[%c0, %c0_0] : memref<17x4xf32, #tpu.memory_space<vmem>>, vector<17x4xf32>
    %c0_1 = arith.constant 0 : index
    %c0_2 = arith.constant 0 : index
    %1 = vector.load %arg4[%c0_1, %c0_2] : memref<32x4xf32, #tpu.memory_space<vmem>>, vector<32x4xf32>
    %c0_3 = arith.constant 0 : index
    %c0_4 = arith.constant 0 : index
    %2 = vector.load %arg5[%c0_3, %c0_4] : memref<1x16xf32, #tpu.memory_space<vmem>>, vector<1x16xf32>
    %c0_5 = arith.constant 0 : index
    %c0_6 = arith.constant 0 : index
    %c0_7 = arith.constant 0 : index
    %3 = vector.load %arg1[%c0_5, %c0_6, %c0_7] : memref<1x4x128xf32, #tpu.memory_space<vmem>>, vector<1x4x128xf32>
    %4 = vector.shape_cast %3 : vector<1x4x128xf32> to vector<4x128xf32>
    %cst = arith.constant dense<0.000000e+00> : vector<17x128xf32>
    %5 = tpu.matmul %0, %4, %cst {dimension_numbers = #tpu.dot_dimension_numbers<[1], [0], [0], [1], [0, 0, 1, 1], [], []>} : vector<17x4xf32>, vector<4x128xf32>, vector<17x128xf32> -> vector<17x128xf32>
    %6 = vector.extract_strided_slice %5 {offsets = [0, 0], sizes = [16, 128], strides = [1, 1]} : vector<17x128xf32> to vector<16x128xf32>
    %7 = vector.extract_strided_slice %5 {offsets = [16, 0], sizes = [1, 128], strides = [1, 1]} : vector<17x128xf32> to vector<1x128xf32>
    %c0_8 = arith.constant 0 : index
    %c0_9 = arith.constant 0 : index
    %c0_10 = arith.constant 0 : index
    %8 = vector.load %arg2[%c0_8, %c0_9, %c0_10] : memref<1x4x3456xf32, #tpu.memory_space<vmem>>, vector<1x4x1024xf32>
    %9 = vector.shape_cast %8 : vector<1x4x1024xf32> to vector<4x1024xf32>
    %cst_11 = arith.constant dense<0.000000e+00> : vector<32x1024xf32>
    %10 = tpu.matmul %1, %9, %cst_11 {dimension_numbers = #tpu.dot_dimension_numbers<[1], [0], [0], [1], [0, 0, 1, 1], [], []>} : vector<32x4xf32>, vector<4x1024xf32>, vector<32x1024xf32> -> vector<32x1024xf32>
    %c0_12 = arith.constant 0 : index
    %c0_13 = arith.constant 0 : index
    %11 = vector.load %arg7[%c0_12, %c0_13] : memref<32x3456xf32, #tpu.memory_space<vmem>>, vector<32x1024xf32>
    tpu.vector_store %arg7[%c0_12, %c0_13], %10 {strides = array<i32>} : memref<32x3456xf32, #tpu.memory_space<vmem>>, vector<32x1024xf32>,
    %c0_14 = arith.constant 0 : index
    %c0_15 = arith.constant 0 : index
    %c1024 = arith.constant 1024 : index
    %12 = vector.load %arg2[%c0_14, %c0_15, %c1024] : memref<1x4x3456xf32, #tpu.memory_space<vmem>>, vector<1x4x1024xf32>
    %13 = vector.shape_cast %12 : vector<1x4x1024xf32> to vector<4x1024xf32>
    %cst_16 = arith.constant dense<0.000000e+00> : vector<32x1024xf32>
    %14 = tpu.matmul %1, %13, %cst_16 {dimension_numbers = #tpu.dot_dimension_numbers<[1], [0], [0], [1], [0, 0, 1, 1], [], []>} : vector<32x4xf32>, vector<4x1024xf32>, vector<32x1024xf32> -> vector<32x1024xf32>
    %c0_17 = arith.constant 0 : index
    %c1024_18 = arith.constant 1024 : index
    %15 = vector.load %arg7[%c0_17, %c1024_18] : memref<32x3456xf32, #tpu.memory_space<vmem>>, vector<32x1024xf32>
    tpu.vector_store %arg7[%c0_17, %c1024_18], %14 {strides = array<i32>} : memref<32x3456xf32, #tpu.memory_space<vmem>>, vector<32x1024xf32>,
    %c0_19 = arith.constant 0 : index
    %c0_20 = arith.constant 0 : index
    %c2048 = arith.constant 2048 : index
    %16 = vector.load %arg2[%c0_19, %c0_20, %c2048] : memref<1x4x3456xf32, #tpu.memory_space<vmem>>, vector<1x4x1024xf32>
    %17 = vector.shape_cast %16 : vector<1x4x1024xf32> to vector<4x1024xf32>
    %cst_21 = arith.constant dense<0.000000e+00> : vector<32x1024xf32>
    %18 = tpu.matmul %1, %17, %cst_21 {dimension_numbers = #tpu.dot_dimension_numbers<[1], [0], [0], [1], [0, 0, 1, 1], [], []>} : vector<32x4xf32>, vector<4x1024xf32>, vector<32x1024xf32> -> vector<32x1024xf32>
    %c0_22 = arith.constant 0 : index
    %c2048_23 = arith.constant 2048 : index
    %19 = vector.load %arg7[%c0_22, %c2048_23] : memref<32x3456xf32, #tpu.memory_space<vmem>>, vector<32x1024xf32>
    tpu.vector_store %arg7[%c0_22, %c2048_23], %18 {strides = array<i32>} : memref<32x3456xf32, #tpu.memory_space<vmem>>, vector<32x1024xf32>,
    %c0_24 = arith.constant 0 : index
    %c0_25 = arith.constant 0 : index
    %c3072 = arith.constant 3072 : index
    %20 = vector.load %arg2[%c0_24, %c0_25, %c3072] : memref<1x4x3456xf32, #tpu.memory_space<vmem>>, vector<1x4x384xf32>
    %21 = vector.shape_cast %20 : vector<1x4x384xf32> to vector<4x384xf32>
    %cst_26 = arith.constant dense<0.000000e+00> : vector<32x384xf32>
    %22 = tpu.matmul %1, %21, %cst_26 {dimension_numbers = #tpu.dot_dimension_numbers<[1], [0], [0], [1], [0, 0, 1, 1], [], []>} : vector<32x4xf32>, vector<4x384xf32>, vector<32x384xf32> -> vector<32x384xf32>
    %c0_27 = arith.constant 0 : index
    %c3072_28 = arith.constant 3072 : index
    %23 = vector.load %arg7[%c0_27, %c3072_28] : memref<32x3456xf32, #tpu.memory_space<vmem>>, vector<32x384xf32>
    tpu.vector_store %arg7[%c0_27, %c3072_28], %22 {strides = array<i32>} : memref<32x3456xf32, #tpu.memory_space<vmem>>, vector<32x384xf32>,
    %c0_29 = arith.constant 0 : index
    %c0_30 = arith.constant 0 : index
    %24 = vector.load %arg7[%c0_29, %c0_30] : memref<32x3456xf32, #tpu.memory_space<vmem>>, vector<16x128xf32>
    %25 = arith.mulf %6, %24 : vector<16x128xf32>
    %c0_31 = arith.constant 0 : index
    %c128 = arith.constant 128 : index
    %26 = vector.load %arg7[%c0_31, %c128] : memref<32x3456xf32, #tpu.memory_space<vmem>>, vector<16x128xf32>
    %27 = arith.mulf %6, %26 : vector<16x128xf32>
    %28 = arith.maximumf %25, %27 : vector<16x128xf32>
    %c0_32 = arith.constant 0 : index
    %c256 = arith.constant 256 : index
    %29 = vector.load %arg7[%c0_32, %c256] : memref<32x3456xf32, #tpu.memory_space<vmem>>, vector<16x128xf32>
    %30 = arith.mulf %6, %29 : vector<16x128xf32>
    %31 = arith.maximumf %28, %30 : vector<16x128xf32>
    %c0_33 = arith.constant 0 : index
    %c384 = arith.constant 384 : index
    %32 = vector.load %arg7[%c0_33, %c384] : memref<32x3456xf32, #tpu.memory_space<vmem>>, vector<16x128xf32>
    %33 = arith.mulf %6, %32 : vector<16x128xf32>
    %34 = arith.maximumf %31, %33 : vector<16x128xf32>
    %c0_34 = arith.constant 0 : index
    %c512 = arith.constant 512 : index
    %35 = vector.load %arg7[%c0_34, %c512] : memref<32x3456xf32, #tpu.memory_space<vmem>>, vector<16x128xf32>
    %36 = arith.mulf %6, %35 : vector<16x128xf32>
    %37 = arith.maximumf %34, %36 : vector<16x128xf32>
    %c0_35 = arith.constant 0 : index
    %c640 = arith.constant 640 : index
    %38 = vector.load %arg7[%c0_35, %c640] : memref<32x3456xf32, #tpu.memory_space<vmem>>, vector<16x128xf32>
    %39 = arith.mulf %6, %38 : vector<16x128xf32>
    %40 = arith.maximumf %37, %39 : vector<16x128xf32>
    %c0_36 = arith.constant 0 : index
    %c768 = arith.constant 768 : index
    %41 = vector.load %arg7[%c0_36, %c768] : memref<32x3456xf32, #tpu.memory_space<vmem>>, vector<16x128xf32>
    %42 = arith.mulf %6, %41 : vector<16x128xf32>
    %43 = arith.maximumf %40, %42 : vector<16x128xf32>
    %c0_37 = arith.constant 0 : index
    %c896 = arith.constant 896 : index
    %44 = vector.load %arg7[%c0_37, %c896] : memref<32x3456xf32, #tpu.memory_space<vmem>>, vector<16x128xf32>
    %45 = arith.mulf %6, %44 : vector<16x128xf32>
    %46 = arith.maximumf %43, %45 : vector<16x128xf32>
    %c0_38 = arith.constant 0 : index
    %c1024_39 = arith.constant 1024 : index
    %47 = vector.load %arg7[%c0_38, %c1024_39] : memref<32x3456xf32, #tpu.memory_space<vmem>>, vector<16x128xf32>
    %48 = arith.mulf %6, %47 : vector<16x128xf32>
    %49 = arith.maximumf %46, %48 : vector<16x128xf32>
    %c0_40 = arith.constant 0 : index
    %c1152 = arith.constant 1152 : index
    %50 = vector.load %arg7[%c0_40, %c1152] : memref<32x3456xf32, #tpu.memory_space<vmem>>, vector<16x128xf32>
    %51 = arith.mulf %6, %50 : vector<16x128xf32>
    %52 = arith.maximumf %49, %51 : vector<16x128xf32>
    %c0_41 = arith.constant 0 : index
    %c1280 = arith.constant 1280 : index
    %53 = vector.load %arg7[%c0_41, %c1280] : memref<32x3456xf32, #tpu.memory_space<vmem>>, vector<16x128xf32>
    %54 = arith.mulf %6, %53 : vector<16x128xf32>
    %55 = arith.maximumf %52, %54 : vector<16x128xf32>
    %c0_42 = arith.constant 0 : index
    %c1408 = arith.constant 1408 : index
    %56 = vector.load %arg7[%c0_42, %c1408] : memref<32x3456xf32, #tpu.memory_space<vmem>>, vector<16x128xf32>
    %57 = arith.mulf %6, %56 : vector<16x128xf32>
    %58 = arith.maximumf %55, %57 : vector<16x128xf32>
    %c0_43 = arith.constant 0 : index
    %c1536 = arith.constant 1536 : index
    %59 = vector.load %arg7[%c0_43, %c1536] : memref<32x3456xf32, #tpu.memory_space<vmem>>, vector<16x128xf32>
    %60 = arith.mulf %6, %59 : vector<16x128xf32>
    %61 = arith.maximumf %58, %60 : vector<16x128xf32>
    %c0_44 = arith.constant 0 : index
    %c1664 = arith.constant 1664 : index
    %62 = vector.load %arg7[%c0_44, %c1664] : memref<32x3456xf32, #tpu.memory_space<vmem>>, vector<16x128xf32>
    %63 = arith.mulf %6, %62 : vector<16x128xf32>
    %64 = arith.maximumf %61, %63 : vector<16x128xf32>
    %c0_45 = arith.constant 0 : index
    %c1792 = arith.constant 1792 : index
    %65 = vector.load %arg7[%c0_45, %c1792] : memref<32x3456xf32, #tpu.memory_space<vmem>>, vector<16x128xf32>
    %66 = arith.mulf %6, %65 : vector<16x128xf32>
    %67 = arith.maximumf %64, %66 : vector<16x128xf32>
    %c0_46 = arith.constant 0 : index
    %c1920 = arith.constant 1920 : index
    %68 = vector.load %arg7[%c0_46, %c1920] : memref<32x3456xf32, #tpu.memory_space<vmem>>, vector<16x128xf32>
    %69 = arith.mulf %6, %68 : vector<16x128xf32>
    %70 = arith.maximumf %67, %69 : vector<16x128xf32>
    %c0_47 = arith.constant 0 : index
    %c2048_48 = arith.constant 2048 : index
    %71 = vector.load %arg7[%c0_47, %c2048_48] : memref<32x3456xf32, #tpu.memory_space<vmem>>, vector<16x128xf32>
    %72 = arith.mulf %6, %71 : vector<16x128xf32>
    %73 = arith.maximumf %70, %72 : vector<16x128xf32>
    %c0_49 = arith.constant 0 : index
    %c2176 = arith.constant 2176 : index
    %74 = vector.load %arg7[%c0_49, %c2176] : memref<32x3456xf32, #tpu.memory_space<vmem>>, vector<16x128xf32>
    %75 = arith.mulf %6, %74 : vector<16x128xf32>
    %76 = arith.maximumf %73, %75 : vector<16x128xf32>
    %c0_50 = arith.constant 0 : index
    %c2304 = arith.constant 2304 : index
    %77 = vector.load %arg7[%c0_50, %c2304] : memref<32x3456xf32, #tpu.memory_space<vmem>>, vector<16x128xf32>
    %78 = arith.mulf %6, %77 : vector<16x128xf32>
    %79 = arith.maximumf %76, %78 : vector<16x128xf32>
    %c0_51 = arith.constant 0 : index
    %c2432 = arith.constant 2432 : index
    %80 = vector.load %arg7[%c0_51, %c2432] : memref<32x3456xf32, #tpu.memory_space<vmem>>, vector<16x128xf32>
    %81 = arith.mulf %6, %80 : vector<16x128xf32>
    %82 = arith.maximumf %79, %81 : vector<16x128xf32>
    %c0_52 = arith.constant 0 : index
    %c2560 = arith.constant 2560 : index
    %83 = vector.load %arg7[%c0_52, %c2560] : memref<32x3456xf32, #tpu.memory_space<vmem>>, vector<16x128xf32>
    %84 = arith.mulf %6, %83 : vector<16x128xf32>
    %85 = arith.maximumf %82, %84 : vector<16x128xf32>
    %c0_53 = arith.constant 0 : index
    %c2688 = arith.constant 2688 : index
    %86 = vector.load %arg7[%c0_53, %c2688] : memref<32x3456xf32, #tpu.memory_space<vmem>>, vector<16x128xf32>
    %87 = arith.mulf %6, %86 : vector<16x128xf32>
    %88 = arith.maximumf %85, %87 : vector<16x128xf32>
    %c0_54 = arith.constant 0 : index
    %c2816 = arith.constant 2816 : index
    %89 = vector.load %arg7[%c0_54, %c2816] : memref<32x3456xf32, #tpu.memory_space<vmem>>, vector<16x128xf32>
    %90 = arith.mulf %6, %89 : vector<16x128xf32>
    %91 = arith.maximumf %88, %90 : vector<16x128xf32>
    %c0_55 = arith.constant 0 : index
    %c2944 = arith.constant 2944 : index
    %92 = vector.load %arg7[%c0_55, %c2944] : memref<32x3456xf32, #tpu.memory_space<vmem>>, vector<16x128xf32>
    %93 = arith.mulf %6, %92 : vector<16x128xf32>
    %94 = arith.maximumf %91, %93 : vector<16x128xf32>
    %c0_56 = arith.constant 0 : index
    %c3072_57 = arith.constant 3072 : index
    %95 = vector.load %arg7[%c0_56, %c3072_57] : memref<32x3456xf32, #tpu.memory_space<vmem>>, vector<16x128xf32>
    %96 = arith.mulf %6, %95 : vector<16x128xf32>
    %97 = arith.maximumf %94, %96 : vector<16x128xf32>
    %c0_58 = arith.constant 0 : index
    %c3200 = arith.constant 3200 : index
    %98 = vector.load %arg7[%c0_58, %c3200] : memref<32x3456xf32, #tpu.memory_space<vmem>>, vector<16x128xf32>
    %99 = arith.mulf %6, %98 : vector<16x128xf32>
    %100 = arith.maximumf %97, %99 : vector<16x128xf32>
    %c0_59 = arith.constant 0 : index
    %c3328 = arith.constant 3328 : index
    %101 = vector.load %arg7[%c0_59, %c3328] : memref<32x3456xf32, #tpu.memory_space<vmem>>, vector<16x128xf32>
    %102 = arith.mulf %6, %101 : vector<16x128xf32>
    %103 = arith.maximumf %100, %102 : vector<16x128xf32>
    %cst_60 = arith.constant 0.000000e+00 : f32
    %104 = vector.broadcast %cst_60 : f32 to vector<16x128xf32>
    %cst_61 = arith.constant 0.000000e+00 : f32
    %105 = vector.broadcast %cst_61 : f32 to vector<16x128xf32>
    %c0_62 = arith.constant 0 : index
    %c0_63 = arith.constant 0 : index
    %106 = vector.load %arg7[%c0_62, %c0_63] : memref<32x3456xf32, #tpu.memory_space<vmem>>, vector<32x128xf32>
    %107 = vector.extract_strided_slice %106 {offsets = [0, 0], sizes = [16, 128], strides = [1, 1]} : vector<32x128xf32> to vector<16x128xf32>
    %108 = arith.mulf %6, %107 : vector<16x128xf32>
    %109 = arith.subf %108, %103 : vector<16x128xf32>
    %110 = math.exp %109 : vector<16x128xf32>
    %111 = arith.addf %104, %110 : vector<16x128xf32>
    %112 = vector.extract_strided_slice %106 {offsets = [16, 0], sizes = [16, 128], strides = [1, 1]} : vector<32x128xf32> to vector<16x128xf32>
    %113 = arith.mulf %110, %112 : vector<16x128xf32>
    %114 = arith.addf %105, %113 : vector<16x128xf32>
    %c0_64 = arith.constant 0 : index
    %c128_65 = arith.constant 128 : index
    %115 = vector.load %arg7[%c0_64, %c128_65] : memref<32x3456xf32, #tpu.memory_space<vmem>>, vector<32x128xf32>
    %116 = vector.extract_strided_slice %115 {offsets = [0, 0], sizes = [16, 128], strides = [1, 1]} : vector<32x128xf32> to vector<16x128xf32>
    %117 = arith.mulf %6, %116 : vector<16x128xf32>
    %118 = arith.subf %117, %103 : vector<16x128xf32>
    %119 = math.exp %118 : vector<16x128xf32>
    %120 = arith.addf %111, %119 : vector<16x128xf32>
    %121 = vector.extract_strided_slice %115 {offsets = [16, 0], sizes = [16, 128], strides = [1, 1]} : vector<32x128xf32> to vector<16x128xf32>
    %122 = arith.mulf %119, %121 : vector<16x128xf32>
    %123 = arith.addf %114, %122 : vector<16x128xf32>
    %c0_66 = arith.constant 0 : index
    %c256_67 = arith.constant 256 : index
    %124 = vector.load %arg7[%c0_66, %c256_67] : memref<32x3456xf32, #tpu.memory_space<vmem>>, vector<32x128xf32>
    %125 = vector.extract_strided_slice %124 {offsets = [0, 0], sizes = [16, 128], strides = [1, 1]} : vector<32x128xf32> to vector<16x128xf32>
    %126 = arith.mulf %6, %125 : vector<16x128xf32>
    %127 = arith.subf %126, %103 : vector<16x128xf32>
    %128 = math.exp %127 : vector<16x128xf32>
    %129 = arith.addf %120, %128 : vector<16x128xf32>
    %130 = vector.extract_strided_slice %124 {offsets = [16, 0], sizes = [16, 128], strides = [1, 1]} : vector<32x128xf32> to vector<16x128xf32>
    %131 = arith.mulf %128, %130 : vector<16x128xf32>
    %132 = arith.addf %123, %131 : vector<16x128xf32>
    %c0_68 = arith.constant 0 : index
    %c384_69 = arith.constant 384 : index
    %133 = vector.load %arg7[%c0_68, %c384_69] : memref<32x3456xf32, #tpu.memory_space<vmem>>, vector<32x128xf32>
    %134 = vector.extract_strided_slice %133 {offsets = [0, 0], sizes = [16, 128], strides = [1, 1]} : vector<32x128xf32> to vector<16x128xf32>
    %135 = arith.mulf %6, %134 : vector<16x128xf32>
    %136 = arith.subf %135, %103 : vector<16x128xf32>
    %137 = math.exp %136 : vector<16x128xf32>
    %138 = arith.addf %129, %137 : vector<16x128xf32>
    %139 = vector.extract_strided_slice %133 {offsets = [16, 0], sizes = [16, 128], strides = [1, 1]} : vector<32x128xf32> to vector<16x128xf32>
    %140 = arith.mulf %137, %139 : vector<16x128xf32>
    %141 = arith.addf %132, %140 : vector<16x128xf32>
    %c0_70 = arith.constant 0 : index
    %c512_71 = arith.constant 512 : index
    %142 = vector.load %arg7[%c0_70, %c512_71] : memref<32x3456xf32, #tpu.memory_space<vmem>>, vector<32x128xf32>
    %143 = vector.extract_strided_slice %142 {offsets = [0, 0], sizes = [16, 128], strides = [1, 1]} : vector<32x128xf32> to vector<16x128xf32>
    %144 = arith.mulf %6, %143 : vector<16x128xf32>
    %145 = arith.subf %144, %103 : vector<16x128xf32>
    %146 = math.exp %145 : vector<16x128xf32>
    %147 = arith.addf %138, %146 : vector<16x128xf32>
    %148 = vector.extract_strided_slice %142 {offsets = [16, 0], sizes = [16, 128], strides = [1, 1]} : vector<32x128xf32> to vector<16x128xf32>
    %149 = arith.mulf %146, %148 : vector<16x128xf32>
    %150 = arith.addf %141, %149 : vector<16x128xf32>
    %c0_72 = arith.constant 0 : index
    %c640_73 = arith.constant 640 : index
    %151 = vector.load %arg7[%c0_72, %c640_73] : memref<32x3456xf32, #tpu.memory_space<vmem>>, vector<32x128xf32>
    %152 = vector.extract_strided_slice %151 {offsets = [0, 0], sizes = [16, 128], strides = [1, 1]} : vector<32x128xf32> to vector<16x128xf32>
    %153 = arith.mulf %6, %152 : vector<16x128xf32>
    %154 = arith.subf %153, %103 : vector<16x128xf32>
    %155 = math.exp %154 : vector<16x128xf32>
    %156 = arith.addf %147, %155 : vector<16x128xf32>
    %157 = vector.extract_strided_slice %151 {offsets = [16, 0], sizes = [16, 128], strides = [1, 1]} : vector<32x128xf32> to vector<16x128xf32>
    %158 = arith.mulf %155, %157 : vector<16x128xf32>
    %159 = arith.addf %150, %158 : vector<16x128xf32>
    %c0_74 = arith.constant 0 : index
    %c768_75 = arith.constant 768 : index
    %160 = vector.load %arg7[%c0_74, %c768_75] : memref<32x3456xf32, #tpu.memory_space<vmem>>, vector<32x128xf32>
    %161 = vector.extract_strided_slice %160 {offsets = [0, 0], sizes = [16, 128], strides = [1, 1]} : vector<32x128xf32> to vector<16x128xf32>
    %162 = arith.mulf %6, %161 : vector<16x128xf32>
    %163 = arith.subf %162, %103 : vector<16x128xf32>
    %164 = math.exp %163 : vector<16x128xf32>
    %165 = arith.addf %156, %164 : vector<16x128xf32>
    %166 = vector.extract_strided_slice %160 {offsets = [16, 0], sizes = [16, 128], strides = [1, 1]} : vector<32x128xf32> to vector<16x128xf32>
    %167 = arith.mulf %164, %166 : vector<16x128xf32>
    %168 = arith.addf %159, %167 : vector<16x128xf32>
    %c0_76 = arith.constant 0 : index
    %c896_77 = arith.constant 896 : index
    %169 = vector.load %arg7[%c0_76, %c896_77] : memref<32x3456xf32, #tpu.memory_space<vmem>>, vector<32x128xf32>
    %170 = vector.extract_strided_slice %169 {offsets = [0, 0], sizes = [16, 128], strides = [1, 1]} : vector<32x128xf32> to vector<16x128xf32>
    %171 = arith.mulf %6, %170 : vector<16x128xf32>
    %172 = arith.subf %171, %103 : vector<16x128xf32>
    %173 = math.exp %172 : vector<16x128xf32>
    %174 = arith.addf %165, %173 : vector<16x128xf32>
    %175 = vector.extract_strided_slice %169 {offsets = [16, 0], sizes = [16, 128], strides = [1, 1]} : vector<32x128xf32> to vector<16x128xf32>
    %176 = arith.mulf %173, %175 : vector<16x128xf32>
    %177 = arith.addf %168, %176 : vector<16x128xf32>
    %c0_78 = arith.constant 0 : index
    %c1024_79 = arith.constant 1024 : index
    %178 = vector.load %arg7[%c0_78, %c1024_79] : memref<32x3456xf32, #tpu.memory_space<vmem>>, vector<32x128xf32>
    %179 = vector.extract_strided_slice %178 {offsets = [0, 0], sizes = [16, 128], strides = [1, 1]} : vector<32x128xf32> to vector<16x128xf32>
    %180 = arith.mulf %6, %179 : vector<16x128xf32>
    %181 = arith.subf %180, %103 : vector<16x128xf32>
    %182 = math.exp %181 : vector<16x128xf32>
    %183 = arith.addf %174, %182 : vector<16x128xf32>
    %184 = vector.extract_strided_slice %178 {offsets = [16, 0], sizes = [16, 128], strides = [1, 1]} : vector<32x128xf32> to vector<16x128xf32>
    %185 = arith.mulf %182, %184 : vector<16x128xf32>
    %186 = arith.addf %177, %185 : vector<16x128xf32>
    %c0_80 = arith.constant 0 : index
    %c1152_81 = arith.constant 1152 : index
    %187 = vector.load %arg7[%c0_80, %c1152_81] : memref<32x3456xf32, #tpu.memory_space<vmem>>, vector<32x128xf32>
    %188 = vector.extract_strided_slice %187 {offsets = [0, 0], sizes = [16, 128], strides = [1, 1]} : vector<32x128xf32> to vector<16x128xf32>
    %189 = arith.mulf %6, %188 : vector<16x128xf32>
    %190 = arith.subf %189, %103 : vector<16x128xf32>
    %191 = math.exp %190 : vector<16x128xf32>
    %192 = arith.addf %183, %191 : vector<16x128xf32>
    %193 = vector.extract_strided_slice %187 {offsets = [16, 0], sizes = [16, 128], strides = [1, 1]} : vector<32x128xf32> to vector<16x128xf32>
    %194 = arith.mulf %191, %193 : vector<16x128xf32>
    %195 = arith.addf %186, %194 : vector<16x128xf32>
    %c0_82 = arith.constant 0 : index
    %c1280_83 = arith.constant 1280 : index
    %196 = vector.load %arg7[%c0_82, %c1280_83] : memref<32x3456xf32, #tpu.memory_space<vmem>>, vector<32x128xf32>
    %197 = vector.extract_strided_slice %196 {offsets = [0, 0], sizes = [16, 128], strides = [1, 1]} : vector<32x128xf32> to vector<16x128xf32>
    %198 = arith.mulf %6, %197 : vector<16x128xf32>
    %199 = arith.subf %198, %103 : vector<16x128xf32>
    %200 = math.exp %199 : vector<16x128xf32>
    %201 = arith.addf %192, %200 : vector<16x128xf32>
    %202 = vector.extract_strided_slice %196 {offsets = [16, 0], sizes = [16, 128], strides = [1, 1]} : vector<32x128xf32> to vector<16x128xf32>
    %203 = arith.mulf %200, %202 : vector<16x128xf32>
    %204 = arith.addf %195, %203 : vector<16x128xf32>
    %c0_84 = arith.constant 0 : index
    %c1408_85 = arith.constant 1408 : index
    %205 = vector.load %arg7[%c0_84, %c1408_85] : memref<32x3456xf32, #tpu.memory_space<vmem>>, vector<32x128xf32>
    %206 = vector.extract_strided_slice %205 {offsets = [0, 0], sizes = [16, 128], strides = [1, 1]} : vector<32x128xf32> to vector<16x128xf32>
    %207 = arith.mulf %6, %206 : vector<16x128xf32>
    %208 = arith.subf %207, %103 : vector<16x128xf32>
    %209 = math.exp %208 : vector<16x128xf32>
    %210 = arith.addf %201, %209 : vector<16x128xf32>
    %211 = vector.extract_strided_slice %205 {offsets = [16, 0], sizes = [16, 128], strides = [1, 1]} : vector<32x128xf32> to vector<16x128xf32>
    %212 = arith.mulf %209, %211 : vector<16x128xf32>
    %213 = arith.addf %204, %212 : vector<16x128xf32>
    %c0_86 = arith.constant 0 : index
    %c1536_87 = arith.constant 1536 : index
    %214 = vector.load %arg7[%c0_86, %c1536_87] : memref<32x3456xf32, #tpu.memory_space<vmem>>, vector<32x128xf32>
    %215 = vector.extract_strided_slice %214 {offsets = [0, 0], sizes = [16, 128], strides = [1, 1]} : vector<32x128xf32> to vector<16x128xf32>
    %216 = arith.mulf %6, %215 : vector<16x128xf32>
    %217 = arith.subf %216, %103 : vector<16x128xf32>
    %218 = math.exp %217 : vector<16x128xf32>
    %219 = arith.addf %210, %218 : vector<16x128xf32>
    %220 = vector.extract_strided_slice %214 {offsets = [16, 0], sizes = [16, 128], strides = [1, 1]} : vector<32x128xf32> to vector<16x128xf32>
    %221 = arith.mulf %218, %220 : vector<16x128xf32>
    %222 = arith.addf %213, %221 : vector<16x128xf32>
    %c0_88 = arith.constant 0 : index
    %c1664_89 = arith.constant 1664 : index
    %223 = vector.load %arg7[%c0_88, %c1664_89] : memref<32x3456xf32, #tpu.memory_space<vmem>>, vector<32x128xf32>
    %224 = vector.extract_strided_slice %223 {offsets = [0, 0], sizes = [16, 128], strides = [1, 1]} : vector<32x128xf32> to vector<16x128xf32>
    %225 = arith.mulf %6, %224 : vector<16x128xf32>
    %226 = arith.subf %225, %103 : vector<16x128xf32>
    %227 = math.exp %226 : vector<16x128xf32>
    %228 = arith.addf %219, %227 : vector<16x128xf32>
    %229 = vector.extract_strided_slice %223 {offsets = [16, 0], sizes = [16, 128], strides = [1, 1]} : vector<32x128xf32> to vector<16x128xf32>
    %230 = arith.mulf %227, %229 : vector<16x128xf32>
    %231 = arith.addf %222, %230 : vector<16x128xf32>
    %c0_90 = arith.constant 0 : index
    %c1792_91 = arith.constant 1792 : index
    %232 = vector.load %arg7[%c0_90, %c1792_91] : memref<32x3456xf32, #tpu.memory_space<vmem>>, vector<32x128xf32>
    %233 = vector.extract_strided_slice %232 {offsets = [0, 0], sizes = [16, 128], strides = [1, 1]} : vector<32x128xf32> to vector<16x128xf32>
    %234 = arith.mulf %6, %233 : vector<16x128xf32>
    %235 = arith.subf %234, %103 : vector<16x128xf32>
    %236 = math.exp %235 : vector<16x128xf32>
    %237 = arith.addf %228, %236 : vector<16x128xf32>
    %238 = vector.extract_strided_slice %232 {offsets = [16, 0], sizes = [16, 128], strides = [1, 1]} : vector<32x128xf32> to vector<16x128xf32>
    %239 = arith.mulf %236, %238 : vector<16x128xf32>
    %240 = arith.addf %231, %239 : vector<16x128xf32>
    %c0_92 = arith.constant 0 : index
    %c1920_93 = arith.constant 1920 : index
    %241 = vector.load %arg7[%c0_92, %c1920_93] : memref<32x3456xf32, #tpu.memory_space<vmem>>, vector<32x128xf32>
    %242 = vector.extract_strided_slice %241 {offsets = [0, 0], sizes = [16, 128], strides = [1, 1]} : vector<32x128xf32> to vector<16x128xf32>
    %243 = arith.mulf %6, %242 : vector<16x128xf32>
    %244 = arith.subf %243, %103 : vector<16x128xf32>
    %245 = math.exp %244 : vector<16x128xf32>
    %246 = arith.addf %237, %245 : vector<16x128xf32>
    %247 = vector.extract_strided_slice %241 {offsets = [16, 0], sizes = [16, 128], strides = [1, 1]} : vector<32x128xf32> to vector<16x128xf32>
    %248 = arith.mulf %245, %247 : vector<16x128xf32>
    %249 = arith.addf %240, %248 : vector<16x128xf32>
    %c0_94 = arith.constant 0 : index
    %c2048_95 = arith.constant 2048 : index
    %250 = vector.load %arg7[%c0_94, %c2048_95] : memref<32x3456xf32, #tpu.memory_space<vmem>>, vector<32x128xf32>
    %251 = vector.extract_strided_slice %250 {offsets = [0, 0], sizes = [16, 128], strides = [1, 1]} : vector<32x128xf32> to vector<16x128xf32>
    %252 = arith.mulf %6, %251 : vector<16x128xf32>
    %253 = arith.subf %252, %103 : vector<16x128xf32>
    %254 = math.exp %253 : vector<16x128xf32>
    %255 = arith.addf %246, %254 : vector<16x128xf32>
    %256 = vector.extract_strided_slice %250 {offsets = [16, 0], sizes = [16, 128], strides = [1, 1]} : vector<32x128xf32> to vector<16x128xf32>
    %257 = arith.mulf %254, %256 : vector<16x128xf32>
    %258 = arith.addf %249, %257 : vector<16x128xf32>
    %c0_96 = arith.constant 0 : index
    %c2176_97 = arith.constant 2176 : index
    %259 = vector.load %arg7[%c0_96, %c2176_97] : memref<32x3456xf32, #tpu.memory_space<vmem>>, vector<32x128xf32>
    %260 = vector.extract_strided_slice %259 {offsets = [0, 0], sizes = [16, 128], strides = [1, 1]} : vector<32x128xf32> to vector<16x128xf32>
    %261 = arith.mulf %6, %260 : vector<16x128xf32>
    %262 = arith.subf %261, %103 : vector<16x128xf32>
    %263 = math.exp %262 : vector<16x128xf32>
    %264 = arith.addf %255, %263 : vector<16x128xf32>
    %265 = vector.extract_strided_slice %259 {offsets = [16, 0], sizes = [16, 128], strides = [1, 1]} : vector<32x128xf32> to vector<16x128xf32>
    %266 = arith.mulf %263, %265 : vector<16x128xf32>
    %267 = arith.addf %258, %266 : vector<16x128xf32>
    %c0_98 = arith.constant 0 : index
    %c2304_99 = arith.constant 2304 : index
    %268 = vector.load %arg7[%c0_98, %c2304_99] : memref<32x3456xf32, #tpu.memory_space<vmem>>, vector<32x128xf32>
    %269 = vector.extract_strided_slice %268 {offsets = [0, 0], sizes = [16, 128], strides = [1, 1]} : vector<32x128xf32> to vector<16x128xf32>
    %270 = arith.mulf %6, %269 : vector<16x128xf32>
    %271 = arith.subf %270, %103 : vector<16x128xf32>
    %272 = math.exp %271 : vector<16x128xf32>
    %273 = arith.addf %264, %272 : vector<16x128xf32>
    %274 = vector.extract_strided_slice %268 {offsets = [16, 0], sizes = [16, 128], strides = [1, 1]} : vector<32x128xf32> to vector<16x128xf32>
    %275 = arith.mulf %272, %274 : vector<16x128xf32>
    %276 = arith.addf %267, %275 : vector<16x128xf32>
    %c0_100 = arith.constant 0 : index
    %c2432_101 = arith.constant 2432 : index
    %277 = vector.load %arg7[%c0_100, %c2432_101] : memref<32x3456xf32, #tpu.memory_space<vmem>>, vector<32x128xf32>
    %278 = vector.extract_strided_slice %277 {offsets = [0, 0], sizes = [16, 128], strides = [1, 1]} : vector<32x128xf32> to vector<16x128xf32>
    %279 = arith.mulf %6, %278 : vector<16x128xf32>
    %280 = arith.subf %279, %103 : vector<16x128xf32>
    %281 = math.exp %280 : vector<16x128xf32>
    %282 = arith.addf %273, %281 : vector<16x128xf32>
    %283 = vector.extract_strided_slice %277 {offsets = [16, 0], sizes = [16, 128], strides = [1, 1]} : vector<32x128xf32> to vector<16x128xf32>
    %284 = arith.mulf %281, %283 : vector<16x128xf32>
    %285 = arith.addf %276, %284 : vector<16x128xf32>
    %c0_102 = arith.constant 0 : index
    %c2560_103 = arith.constant 2560 : index
    %286 = vector.load %arg7[%c0_102, %c2560_103] : memref<32x3456xf32, #tpu.memory_space<vmem>>, vector<32x128xf32>
    %287 = vector.extract_strided_slice %286 {offsets = [0, 0], sizes = [16, 128], strides = [1, 1]} : vector<32x128xf32> to vector<16x128xf32>
    %288 = arith.mulf %6, %287 : vector<16x128xf32>
    %289 = arith.subf %288, %103 : vector<16x128xf32>
    %290 = math.exp %289 : vector<16x128xf32>
    %291 = arith.addf %282, %290 : vector<16x128xf32>
    %292 = vector.extract_strided_slice %286 {offsets = [16, 0], sizes = [16, 128], strides = [1, 1]} : vector<32x128xf32> to vector<16x128xf32>
    %293 = arith.mulf %290, %292 : vector<16x128xf32>
    %294 = arith.addf %285, %293 : vector<16x128xf32>
    %c0_104 = arith.constant 0 : index
    %c2688_105 = arith.constant 2688 : index
    %295 = vector.load %arg7[%c0_104, %c2688_105] : memref<32x3456xf32, #tpu.memory_space<vmem>>, vector<32x128xf32>
    %296 = vector.extract_strided_slice %295 {offsets = [0, 0], sizes = [16, 128], strides = [1, 1]} : vector<32x128xf32> to vector<16x128xf32>
    %297 = arith.mulf %6, %296 : vector<16x128xf32>
    %298 = arith.subf %297, %103 : vector<16x128xf32>
    %299 = math.exp %298 : vector<16x128xf32>
    %300 = arith.addf %291, %299 : vector<16x128xf32>
    %301 = vector.extract_strided_slice %295 {offsets = [16, 0], sizes = [16, 128], strides = [1, 1]} : vector<32x128xf32> to vector<16x128xf32>
    %302 = arith.mulf %299, %301 : vector<16x128xf32>
    %303 = arith.addf %294, %302 : vector<16x128xf32>
    %c0_106 = arith.constant 0 : index
    %c2816_107 = arith.constant 2816 : index
    %304 = vector.load %arg7[%c0_106, %c2816_107] : memref<32x3456xf32, #tpu.memory_space<vmem>>, vector<32x128xf32>
    %305 = vector.extract_strided_slice %304 {offsets = [0, 0], sizes = [16, 128], strides = [1, 1]} : vector<32x128xf32> to vector<16x128xf32>
    %306 = arith.mulf %6, %305 : vector<16x128xf32>
    %307 = arith.subf %306, %103 : vector<16x128xf32>
    %308 = math.exp %307 : vector<16x128xf32>
    %309 = arith.addf %300, %308 : vector<16x128xf32>
    %310 = vector.extract_strided_slice %304 {offsets = [16, 0], sizes = [16, 128], strides = [1, 1]} : vector<32x128xf32> to vector<16x128xf32>
    %311 = arith.mulf %308, %310 : vector<16x128xf32>
    %312 = arith.addf %303, %311 : vector<16x128xf32>
    %c0_108 = arith.constant 0 : index
    %c2944_109 = arith.constant 2944 : index
    %313 = vector.load %arg7[%c0_108, %c2944_109] : memref<32x3456xf32, #tpu.memory_space<vmem>>, vector<32x128xf32>
    %314 = vector.extract_strided_slice %313 {offsets = [0, 0], sizes = [16, 128], strides = [1, 1]} : vector<32x128xf32> to vector<16x128xf32>
    %315 = arith.mulf %6, %314 : vector<16x128xf32>
    %316 = arith.subf %315, %103 : vector<16x128xf32>
    %317 = math.exp %316 : vector<16x128xf32>
    %318 = arith.addf %309, %317 : vector<16x128xf32>
    %319 = vector.extract_strided_slice %313 {offsets = [16, 0], sizes = [16, 128], strides = [1, 1]} : vector<32x128xf32> to vector<16x128xf32>
    %320 = arith.mulf %317, %319 : vector<16x128xf32>
    %321 = arith.addf %312, %320 : vector<16x128xf32>
    %c0_110 = arith.constant 0 : index
    %c3072_111 = arith.constant 3072 : index
    %322 = vector.load %arg7[%c0_110, %c3072_111] : memref<32x3456xf32, #tpu.memory_space<vmem>>, vector<32x128xf32>
    %323 = vector.extract_strided_slice %322 {offsets = [0, 0], sizes = [16, 128], strides = [1, 1]} : vector<32x128xf32> to vector<16x128xf32>
    %324 = arith.mulf %6, %323 : vector<16x128xf32>
    %325 = arith.subf %324, %103 : vector<16x128xf32>
    %326 = math.exp %325 : vector<16x128xf32>
    %327 = arith.addf %318, %326 : vector<16x128xf32>
    %328 = vector.extract_strided_slice %322 {offsets = [16, 0], sizes = [16, 128], strides = [1, 1]} : vector<32x128xf32> to vector<16x128xf32>
    %329 = arith.mulf %326, %328 : vector<16x128xf32>
    %330 = arith.addf %321, %329 : vector<16x128xf32>
    %c0_112 = arith.constant 0 : index
    %c3200_113 = arith.constant 3200 : index
    %331 = vector.load %arg7[%c0_112, %c3200_113] : memref<32x3456xf32, #tpu.memory_space<vmem>>, vector<32x128xf32>
    %332 = vector.extract_strided_slice %331 {offsets = [0, 0], sizes = [16, 128], strides = [1, 1]} : vector<32x128xf32> to vector<16x128xf32>
    %333 = arith.mulf %6, %332 : vector<16x128xf32>
    %334 = arith.subf %333, %103 : vector<16x128xf32>
    %335 = math.exp %334 : vector<16x128xf32>
    %336 = arith.addf %327, %335 : vector<16x128xf32>
    %337 = vector.extract_strided_slice %331 {offsets = [16, 0], sizes = [16, 128], strides = [1, 1]} : vector<32x128xf32> to vector<16x128xf32>
    %338 = arith.mulf %335, %337 : vector<16x128xf32>
    %339 = arith.addf %330, %338 : vector<16x128xf32>
    %c0_114 = arith.constant 0 : index
    %c3328_115 = arith.constant 3328 : index
    %340 = vector.load %arg7[%c0_114, %c3328_115] : memref<32x3456xf32, #tpu.memory_space<vmem>>, vector<32x128xf32>
    %341 = vector.extract_strided_slice %340 {offsets = [0, 0], sizes = [16, 128], strides = [1, 1]} : vector<32x128xf32> to vector<16x128xf32>
    %342 = arith.mulf %6, %341 : vector<16x128xf32>
    %343 = arith.subf %342, %103 : vector<16x128xf32>
    %344 = math.exp %343 : vector<16x128xf32>
    %345 = arith.addf %336, %344 : vector<16x128xf32>
    %346 = vector.extract_strided_slice %340 {offsets = [16, 0], sizes = [16, 128], strides = [1, 1]} : vector<32x128xf32> to vector<16x128xf32>
    %347 = arith.mulf %344, %346 : vector<16x128xf32>
    %348 = arith.addf %339, %347 : vector<16x128xf32>
    %349 = tpu.reciprocal %345 {approx = true} : vector<16x128xf32> -> vector<16x128xf32>
    %350 = arith.mulf %348, %349 : vector<16x128xf32>
    %cst_116 = arith.constant dense<0.000000e+00> : vector<1x128xf32>
    %351 = tpu.matmul %2, %350, %cst_116 {dimension_numbers = #tpu.dot_dimension_numbers<[1], [0], [0], [1], [0, 0, 1, 1], [], []>} : vector<1x16xf32>, vector<16x128xf32>, vector<1x128xf32> -> vector<1x128xf32>
    %352 = arith.addf %7, %351 : vector<1x128xf32>
    %c0_117 = arith.constant 0 : index
    %c0_118 = arith.constant 0 : index
    %c0_119 = arith.constant 0 : index
    %353 = vector.load %arg6[%c0_117, %c0_118, %c0_119] : memref<1x1x128xf32, #tpu.memory_space<vmem>>, vector<1x1x128xf32>
    %354 = vector.shape_cast %353 : vector<1x1x128xf32> to vector<1x128xf32>
    %355 = vector.shape_cast %352 : vector<1x128xf32> to vector<1x1x128xf32>
    tpu.vector_store %arg6[%c0_117, %c0_118, %c0_119], %355 {strides = array<i32>} : memref<1x1x128xf32, #tpu.memory_space<vmem>>, vector<1x1x128xf32>,
    return
  }
  func.func @transform_0(%arg0: i32) -> (i32, i32, i32) {
    %c0_i32 = arith.constant 0 : i32
    %c0_i32_0 = arith.constant 0 : i32
    %c0_i32_1 = arith.constant 0 : i32
    return %arg0, %c0_i32, %c0_i32_0 : i32, i32, i32
  }
  func.func @transform_1(%arg0: i32) -> (i32, i32, i32) {
    %c0_i32 = arith.constant 0 : i32
    %c0_i32_0 = arith.constant 0 : i32
    %c0_i32_1 = arith.constant 0 : i32
    return %arg0, %c0_i32, %c0_i32_0 : i32, i32, i32
  }
  func.func @transform_2(%arg0: i32) -> (i32, i32) {
    %c0_i32 = arith.constant 0 : i32
    %c0_i32_0 = arith.constant 0 : i32
    %c0_i32_1 = arith.constant 0 : i32
    return %c0_i32, %c0_i32_0 : i32, i32
  }
  func.func @transform_3(%arg0: i32) -> (i32, i32) {
    %c0_i32 = arith.constant 0 : i32
    %c0_i32_0 = arith.constant 0 : i32
    %c0_i32_1 = arith.constant 0 : i32
    return %c0_i32, %c0_i32_0 : i32, i32
  }
  func.func @transform_4(%arg0: i32) -> (i32, i32) {
    %c0_i32 = arith.constant 0 : i32
    %c0_i32_0 = arith.constant 0 : i32
    %c0_i32_1 = arith.constant 0 : i32
    return %c0_i32, %c0_i32_0 : i32, i32
  }
  func.func @transform_5(%arg0: i32) -> (i32, i32, i32) {
    %c0_i32 = arith.constant 0 : i32
    %c0_i32_0 = arith.constant 0 : i32
    %c0_i32_1 = arith.constant 0 : i32
    return %arg0, %c0_i32, %c0_i32_0 : i32, i32, i32
  }
}

</mosaic_0001>

<llo_original>
// kernel: tpu_custom_call.1
$region0: #{tpu_custom_call.1}
  #allocation0 [shape = 'u32[]', space=smem, size = 0x4, offset = 0x4, fixed_abs, tag = 'smem constant byte address 0x4 - core index']
  #allocation1 [shape = 'u32[144,128]{1,0:T(1,128)}', space=vmem, size = 0x12000, scoped, tag = 'internal scratch']
  #allocation2 [shape = 'f32[32,3456]{1,0:T(8,128)}', space=vmem, size = 0x6c000, scoped, tag = 'scratch operand']
  %s0 = inlined_call_operand.vmem [shape: f32[1,4,128], index: 0, kind: input, shape index: {}]
  %s1 = inlined_call_operand.hbm [shape: f32[1,4,3456], index: 1, kind: input, shape index: {}]
  %s2 = inlined_call_operand.vmem [shape: f32[17,4], index: 2, kind: input, shape index: {}]
  %s3 = inlined_call_operand.vmem [shape: f32[32,4], index: 3, kind: input, shape index: {}]
  %s4 = inlined_call_operand.vmem [shape: f32[1,16], index: 4, kind: input, shape index: {}]
  %s5 = inlined_call_operand.hbm [shape: f32[1,1,128], index: 5, kind: output, shape index: {}]
  %s6 = sld [smem:[#allocation0]]
  $region34: #{tpu_custom_call.1} parent=0
    _
  %s8 = ssub.s32 1, %s6
  %s9 = scalar_select 0, %s8, %s6
  $region1: #{tpu_custom_call.1} parent=0
    #allocation3 [shape = 'u8[55296]{0}', space=vmem, size = 0xd800, scoped, tag = 'input window, operand 1, single buffered']
    #allocation4 [shape = 's32[1]{0}', space=sflag, size = 0x4, scoped, tag = 'scoped memory for tpu_custom_call.1']
    #allocation5 [shape = 's32[1]{0}', space=sflag, size = 0x4, scoped, tag = 'scoped memory for tpu_custom_call.1']
    #allocation6 [shape = 'u8[512]{0}', space=vmem, size = 0x400, scoped, tag = 'output window, operand 0, single buffered']
    %10 = vsyncpa [#allocation4], 0
    %11 = vsyncpa [#allocation5], 0
    // Predicated region
    $region2: #{tpu_custom_call.1} parent=1 // pred_check
      _
    $region3: #{tpu_custom_call.1} parent=1 // pred_check_branch
      %13 = sbr.rel (0) target = $region5
    $region4: #{tpu_custom_call.1} parent=1 // pred_region
      _
    $region5: #{tpu_custom_call.1} parent=1 // pred_fallthru
      _
    // Predicated region
    $region6: #{tpu_custom_call.1} parent=1 // pred_check
      _
    $region7: #{tpu_custom_call.1} parent=1 // pred_check_branch
      %15 = sbr.rel (0) target = $region9
    $region8: #{tpu_custom_call.1} parent=1 // pred_region
      %s17 = ssub.s32 1728, 1728
      %18 = vsyncadd [#allocation4], %s17
      %s20 = sshll.u32 [#allocation3], 4
      %s21 = int_to_ptr.vmem [resolvable:$true] %s20
      %23 = dma.hbm_to_vmem [thread:$0]  %s1, 1728, %s21, [#allocation4]
    $region9: #{tpu_custom_call.1} parent=1 // pred_fallthru
      _
    // Predicated region
    $region10: #{tpu_custom_call.1} parent=1 // pred_check
      _
    $region11: #{tpu_custom_call.1} parent=1 // pred_check_branch
      %25 = sbr.rel (0) target = $region13
    $region12: #{tpu_custom_call.1} parent=1 // pred_region
      _
    $region13: #{tpu_custom_call.1} parent=1 // pred_fallthru
      _
    // Predicated region
    $region14: #{tpu_custom_call.1} parent=1 // pred_check
      _
    $region15: #{tpu_custom_call.1} parent=1 // pred_check_branch
      %27 = sbr.rel (0) target = $region17
    $region16: #{tpu_custom_call.1} parent=1 // pred_region
      _
    $region17: #{tpu_custom_call.1} parent=1 // pred_fallthru
      _
    // Predicated region
    $region18: #{tpu_custom_call.1} parent=1 // pred_check
      _
    $region19: #{tpu_custom_call.1} parent=1 // pred_check_branch
      %29 = sbr.rel (0) target = $region21
    $region20: #{tpu_custom_call.1} parent=1 // pred_region
      _
    $region21: #{tpu_custom_call.1} parent=1 // pred_fallthru
      _
    // Predicated region
    $region22: #{tpu_custom_call.1} parent=1 // pred_check
      _
    $region23: #{tpu_custom_call.1} parent=1 // pred_check_branch
      %31 = sbr.rel (0) target = $region25
    $region24: #{tpu_custom_call.1} parent=1 // pred_region
      %32 = dma.done [#allocation4], 1728
    $region25: #{tpu_custom_call.1} parent=1 // pred_fallthru
      _
    %v33 = vld [vmem:[%s2] sm:$0xff]
    %v34 = vld [vmem:[%s2 + $0x8] sm:$0xff]
    %v35 = vld [vmem:[%s2 + $0x10] sm:$0x1]
    %v36 = vld [vmem:[%s3] sm:$0xff]
    %v37 = vld [vmem:[%s3 + $0x8] sm:$0xff]
    %v38 = vld [vmem:[%s3 + $0x10] sm:$0xff]
    %v39 = vld [vmem:[%s3 + $0x18] sm:$0xff]
    %v40 = vld [vmem:[%s4] sm:$0x1]
    %v41 = vld [vmem:[%s0] sm:$0xf]
    %vm42 = vcmask 31744
    %v44 = vsel %vm42, %v33, 0
    %v47 = vsel %vm42, %v34, 0
    %v50 = vsel %vm42, %v35, 0
    %vm52 = vcmask 1043456
    %v54 = vsel %vm52, %v41, 0
    %56 = vmatprep.subr.mxu0 0.0
    %57 = vmatpush1.msra.mxu0 %v54
    %58 = vmatprep.subr.mxu0 0.0
    %59 = vmatpush1.msra.mxu0 0.0
    %60 = vmatprep.subr.mxu0 0.0
    %61 = vmatpush1.msra.mxu0 0.0
    %62 = vmatprep.subr.mxu0 0.0
    %63 = vmatpush1.msra.mxu0 0.0
    %64 = vmatprep.subr.mxu0 0.0
    %65 = vmatpush1.msra.mxu0 0.0
    %66 = vmatprep.subr.mxu0 0.0
    %67 = vmatpush1.msra.mxu0 0.0
    %68 = vmatprep.subr.mxu0 0.0
    %69 = vmatpush1.msra.mxu0 0.0
    %70 = vmatprep.subr.mxu0 0.0
    %71 = vmatpush1.msra.mxu0 0.0
    %72 = vmatprep.subr.mxu0 0.0
    %73 = vmatpush1.msra.mxu0 0.0
    %74 = vmatprep.subr.mxu0 0.0
    %75 = vmatpush1.msra.mxu0 0.0
    %76 = vmatprep.subr.mxu0 0.0
    %77 = vmatpush1.msra.mxu0 0.0
    %78 = vmatprep.subr.mxu0 0.0
    %79 = vmatpush1.msra.mxu0 0.0
    %80 = vmatprep.subr.mxu0 0.0
    %81 = vmatpush1.msra.mxu0 0.0
    %82 = vmatprep.subr.mxu0 0.0
    %83 = vmatpush1.msra.mxu0 0.0
    %84 = vmatprep.subr.mxu0 0.0
    %85 = vmatpush1.msra.mxu0 0.0
    %86 = vmatprep.subr.mxu0 0.0
    %87 = vmatpush1.msra.mxu0 0.0
    %88 = vmatprep.subr.mxu0 0.0
    %89 = vmatpush1.msra.mxu0 0.0
    %90 = vmatprep.subr.mxu0 0.0
    %91 = vmatpush1.msra.mxu0 0.0
    %92 = vmatprep.subr.mxu0 0.0
    %93 = vmatpush1.msra.mxu0 0.0
    %94 = vmatprep.subr.mxu0 0.0
    %95 = vmatpush1.msra.mxu0 0.0
    %96 = vmatprep.subr.mxu0 0.0
    %97 = vmatpush1.msra.mxu0 0.0
    %98 = vmatprep.subr.mxu0 0.0
    %99 = vmatpush1.msra.mxu0 0.0
    %100 = vmatprep.subr.mxu0 0.0
    %101 = vmatpush1.msra.mxu0 0.0
    %102 = vmatprep.subr.mxu0 0.0
    %103 = vmatpush1.msra.mxu0 0.0
    %104 = vmatprep.subr.mxu0 0.0
    %105 = vmatpush1.msra.mxu0 0.0
    %106 = vmatprep.subr.mxu0 0.0
    %107 = vmatpush1.msra.mxu0 0.0
    %108 = vmatprep.subr.mxu0 0.0
    %109 = vmatpush1.msra.mxu0 0.0
    %110 = vmatprep.subr.mxu0 0.0
    %111 = vmatpush1.msra.mxu0 0.0
    %112 = vmatprep.subr.mxu0 0.0
    %113 = vmatpush1.msra.mxu0 0.0
    %114 = vmatprep.subr.mxu0 0.0
    %115 = vmatpush1.msra.mxu0 0.0
    %116 = vmatprep.subr.mxu0 0.0
    %117 = vmatpush1.msra.mxu0 0.0
    %118 = vmatprep.subr.mxu0 0.0
    %119 = vmatpush1.msra.mxu0 0.0
    %120 = vmatprep.mubr.f32.mxu0 0.0
    %121 = vmatmul.mubr.f32.gmra.mrb[0].mxu0 %v44
    %v122 = vpop.f32.mrb[0].mxu0
    %v123 = vadd.f32 0.0, %v122
    %v124 = vpop.f32.mrb[0].mxu0
    %125 = vmatprep.mubr.f32.mxu0 0.0
    %126 = vmatmul.mubr.f32.gmra.mrb[0].mxu0 %v47
    %v127 = vpop.f32.mrb[0].mxu0
    %v128 = vadd.f32 0.0, %v127
    %v129 = vpop.f32.mrb[0].mxu0
    %130 = vmatprep.mubr.f32.mxu0 0.0
    %131 = vmatmul.mubr.f32.gmra.mrb[0].mxu0 %v50
    %v132 = vpop.f32.mrb[0].mxu0
    %v133 = vadd.f32 0.0, %v132
    %v134 = vpop.f32.mrb[0].mxu0
    %135 = vdwg.mxu0
    %v136 = vld [vmem:[#allocation3] sm:$0xff]
    %v137 = vld [vmem:[#allocation3 + $0x8] sm:$0xff]
    %v138 = vld [vmem:[#allocation3 + $0x10] sm:$0xff]
    %v139 = vld [vmem:[#allocation3 + $0x18] sm:$0xff]
    %v144 = vcombine.high %v136, %v136
    %v145 = vcombine.high %v137, %v137
    %v146 = vcombine.high %v138, %v138
    %v147 = vcombine.high %v139, %v139
    %v149 = vsel %vm42, %v36, 0
    %v152 = vsel %vm42, %v37, 0
    %v155 = vsel %vm42, %v38, 0
    %v158 = vsel %vm42, %v39, 0
    %v160 = vsel %vm52, %v136, 0
    %v162 = vsel %vm52, %v144, 0
    %v164 = vsel %vm52, %v137, 0
    %v166 = vsel %vm52, %v145, 0
    %v168 = vsel %vm52, %v138, 0
    %v170 = vsel %vm52, %v146, 0
    %v172 = vsel %vm52, %v139, 0
    %v174 = vsel %vm52, %v147, 0
    %176 = vmatprep.subr.mxu0 %v162
    %177 = vmatpush1.msra.mxu0 %v160
    %178 = vmatprep.subr.mxu0 0.0
    %179 = vmatpush1.msra.mxu0 0.0
    %180 = vmatprep.subr.mxu0 0.0
    %181 = vmatpush1.msra.mxu0 0.0
    %182 = vmatprep.subr.mxu0 0.0
    %183 = vmatpush1.msra.mxu0 0.0
    %184 = vmatprep.subr.mxu0 0.0
    %185 = vmatpush1.msra.mxu0 0.0
    %186 = vmatprep.subr.mxu0 0.0
    %187 = vmatpush1.msra.mxu0 0.0
    %188 = vmatprep.subr.mxu0 0.0
    %189 = vmatpush1.msra.mxu0 0.0
    %190 = vmatprep.subr.mxu0 0.0
    %191 = vmatpush1.msra.mxu0 0.0
    %192 = vmatprep.subr.mxu0 0.0
    %193 = vmatpush1.msra.mxu0 0.0
    %194 = vmatprep.subr.mxu0 0.0
    %195 = vmatpush1.msra.mxu0 0.0
    %196 = vmatprep.subr.mxu0 0.0
    %197 = vmatpush1.msra.mxu0 0.0
    %198 = vmatprep.subr.mxu0 0.0
    %199 = vmatpush1.msra.mxu0 0.0
    %200 = vmatprep.subr.mxu0 0.0
    %201 = vmatpush1.msra.mxu0 0.0
    %202 = vmatprep.subr.mxu0 0.0
    %203 = vmatpush1.msra.mxu0 0.0
    %204 = vmatprep.subr.mxu0 0.0
    %205 = vmatpush1.msra.mxu0 0.0
    %206 = vmatprep.subr.mxu0 0.0
    %207 = vmatpush1.msra.mxu0 0.0
    %208 = vmatprep.subr.mxu0 0.0
    %209 = vmatpush1.msra.mxu0 0.0
    %210 = vmatprep.subr.mxu0 0.0
    %211 = vmatpush1.msra.mxu0 0.0
    %212 = vmatprep.subr.mxu0 0.0
    %213 = vmatpush1.msra.mxu0 0.0
    %214 = vmatprep.subr.mxu0 0.0
    %215 = vmatpush1.msra.mxu0 0.0
    %216 = vmatprep.subr.mxu0 0.0
    %217 = vmatpush1.msra.mxu0 0.0
    %218 = vmatprep.subr.mxu0 0.0
    %219 = vmatpush1.msra.mxu0 0.0
    %220 = vmatprep.subr.mxu0 0.0
    %221 = vmatpush1.msra.mxu0 0.0
    %222 = vmatprep.subr.mxu0 0.0
    %223 = vmatpush1.msra.mxu0 0.0
    %224 = vmatprep.subr.mxu0 0.0
    %225 = vmatpush1.msra.mxu0 0.0
    %226 = vmatprep.subr.mxu0 0.0
    %227 = vmatpush1.msra.mxu0 0.0
    %228 = vmatprep.subr.mxu0 0.0
    %229 = vmatpush1.msra.mxu0 0.0
    %230 = vmatprep.subr.mxu0 0.0
    %231 = vmatpush1.msra.mxu0 0.0
    %232 = vmatprep.subr.mxu0 0.0
    %233 = vmatpush1.msra.mxu0 0.0
    %234 = vmatprep.subr.mxu0 0.0
    %235 = vmatpush1.msra.mxu0 0.0
    %236 = vmatprep.subr.mxu0 0.0
    %237 = vmatpush1.msra.mxu0 0.0
    %238 = vmatprep.subr.mxu0 0.0
    %239 = vmatpush1.msra.mxu0 0.0
    %240 = vmatprep.mubr.f32.mxu0 0.0
    %241 = vmatmul.mubr.f32.gmra.mrb[0].mxu0 %v149
    %v242 = vpop.f32.mrb[0].mxu0
    %v243 = vadd.f32 0.0, %v242
    %v244 = vpop.f32.mrb[0].mxu0
    %v245 = vadd.f32 0.0, %v244
    %246 = vmatprep.mubr.f32.mxu0 0.0
    %247 = vmatmul.mubr.f32.gmra.mrb[0].mxu0 %v152
    %v248 = vpop.f32.mrb[0].mxu0
    %v249 = vadd.f32 0.0, %v248
    %v250 = vpop.f32.mrb[0].mxu0
    %v251 = vadd.f32 0.0, %v250
    %252 = vmatprep.mubr.f32.mxu0 0.0
    %253 = vmatmul.mubr.f32.gmra.mrb[0].mxu0 %v155
    %v254 = vpop.f32.mrb[0].mxu0
    %v255 = vadd.f32 0.0, %v254
    %v256 = vpop.f32.mrb[0].mxu0
    %v257 = vadd.f32 0.0, %v256
    %258 = vmatprep.mubr.f32.mxu0 0.0
    %259 = vmatmul.mubr.f32.gmra.mrb[0].mxu0 %v158
    %v260 = vpop.f32.mrb[0].mxu0
    %v261 = vadd.f32 0.0, %v260
    %v262 = vpop.f32.mrb[0].mxu0
    %v263 = vadd.f32 0.0, %v262
    %264 = vdwg.mxu0
    %265 = vmatprep.subr.mxu0 %v166
    %266 = vmatpush1.msra.mxu0 %v164
    %267 = vmatprep.subr.mxu0 0.0
    %268 = vmatpush1.msra.mxu0 0.0
    %269 = vmatprep.subr.mxu0 0.0
    %270 = vmatpush1.msra.mxu0 0.0
    %271 = vmatprep.subr.mxu0 0.0
    %272 = vmatpush1.msra.mxu0 0.0
    %273 = vmatprep.subr.mxu0 0.0
    %274 = vmatpush1.msra.mxu0 0.0
    %275 = vmatprep.subr.mxu0 0.0
    %276 = vmatpush1.msra.mxu0 0.0
    %277 = vmatprep.subr.mxu0 0.0
    %278 = vmatpush1.msra.mxu0 0.0
    %279 = vmatprep.subr.mxu0 0.0
    %280 = vmatpush1.msra.mxu0 0.0
    %281 = vmatprep.subr.mxu0 0.0
    %282 = vmatpush1.msra.mxu0 0.0
    %283 = vmatprep.subr.mxu0 0.0
    %284 = vmatpush1.msra.mxu0 0.0
    %285 = vmatprep.subr.mxu0 0.0
    %286 = vmatpush1.msra.mxu0 0.0
    %287 = vmatprep.subr.mxu0 0.0
    %288 = vmatpush1.msra.mxu0 0.0
    %289 = vmatprep.subr.mxu0 0.0
    %290 = vmatpush1.msra.mxu0 0.0
    %291 = vmatprep.subr.mxu0 0.0
    %292 = vmatpush1.msra.mxu0 0.0
    %293 = vmatprep.subr.mxu0 0.0
    %294 = vmatpush1.msra.mxu0 0.0
    %295 = vmatprep.subr.mxu0 0.0
    %296 = vmatpush1.msra.mxu0 0.0
    %297 = vmatprep.subr.mxu0 0.0
    %298 = vmatpush1.msra.mxu0 0.0
    %299 = vmatprep.subr.mxu0 0.0
    %300 = vmatpush1.msra.mxu0 0.0
    %301 = vmatprep.subr.mxu0 0.0
    %302 = vmatpush1.msra.mxu0 0.0
    %303 = vmatprep.subr.mxu0 0.0
    %304 = vmatpush1.msra.mxu0 0.0
    %305 = vmatprep.subr.mxu0 0.0
    %306 = vmatpush1.msra.mxu0 0.0
    %307 = vmatprep.subr.mxu0 0.0
    %308 = vmatpush1.msra.mxu0 0.0
    %309 = vmatprep.subr.mxu0 0.0
    %310 = vmatpush1.msra.mxu0 0.0
    %311 = vmatprep.subr.mxu0 0.0
    %312 = vmatpush1.msra.mxu0 0.0
    %313 = vmatprep.subr.mxu0 0.0
    %314 = vmatpush1.msra.mxu0 0.0
    %315 = vmatprep.subr.mxu0 0.0
    %316 = vmatpush1.msra.mxu0 0.0
    %317 = vmatprep.subr.mxu0 0.0
    %318 = vmatpush1.msra.mxu0 0.0
    %319 = vmatprep.subr.mxu0 0.0
    %320 = vmatpush1.msra.mxu0 0.0
    %321 = vmatprep.subr.mxu0 0.0
    %322 = vmatpush1.msra.mxu0 0.0
    %323 = vmatprep.subr.mxu0 0.0
    %324 = vmatpush1.msra.mxu0 0.0
    %325 = vmatprep.subr.mxu0 0.0
    %326 = vmatpush1.msra.mxu0 0.0
    %327 = vmatprep.subr.mxu0 0.0
    %328 = vmatpush1.msra.mxu0 0.0
    %329 = vmatprep.mubr.f32.mxu0 0.0
    %330 = vmatmul.mubr.f32.gmra.mrb[0].mxu0 %v149
    %v331 = vpop.f32.mrb[0].mxu0
    %v332 = vadd.f32 0.0, %v331
    %v333 = vpop.f32.mrb[0].mxu0
    %v334 = vadd.f32 0.0, %v333
    %335 = vmatprep.mubr.f32.mxu0 0.0
    %336 = vmatmul.mubr.f32.gmra.mrb[0].mxu0 %v152
    %v337 = vpop.f32.mrb[0].mxu0
    %v338 = vadd.f32 0.0, %v337
    %v339 = vpop.f32.mrb[0].mxu0
    %v340 = vadd.f32 0.0, %v339
    %341 = vmatprep.mubr.f32.mxu0 0.0
    %342 = vmatmul.mubr.f32.gmra.mrb[0].mxu0 %v155
    %v343 = vpop.f32.mrb[0].mxu0
    %v344 = vadd.f32 0.0, %v343
    %v345 = vpop.f32.mrb[0].mxu0
    %v346 = vadd.f32 0.0, %v345
    %347 = vmatprep.mubr.f32.mxu0 0.0
    %348 = vmatmul.mubr.f32.gmra.mrb[0].mxu0 %v158
    %v349 = vpop.f32.mrb[0].mxu0
    %v350 = vadd.f32 0.0, %v349
    %v351 = vpop.f32.mrb[0].mxu0
    %v352 = vadd.f32 0.0, %v351
    %353 = vdwg.mxu0
    %354 = vmatprep.subr.mxu0 %v170
    %355 = vmatpush1.msra.mxu0 %v168
    %356 = vmatprep.subr.mxu0 0.0
    %357 = vmatpush1.msra.mxu0 0.0
    %358 = vmatprep.subr.mxu0 0.0
    %359 = vmatpush1.msra.mxu0 0.0
    %360 = vmatprep.subr.mxu0 0.0
    %361 = vmatpush1.msra.mxu0 0.0
    %362 = vmatprep.subr.mxu0 0.0
    %363 = vmatpush1.msra.mxu0 0.0
    %364 = vmatprep.subr.mxu0 0.0
    %365 = vmatpush1.msra.mxu0 0.0
    %366 = vmatprep.subr.mxu0 0.0
    %367 = vmatpush1.msra.mxu0 0.0
    %368 = vmatprep.subr.mxu0 0.0
    %369 = vmatpush1.msra.mxu0 0.0
    %370 = vmatprep.subr.mxu0 0.0
    %371 = vmatpush1.msra.mxu0 0.0
    %372 = vmatprep.subr.mxu0 0.0
    %373 = vmatpush1.msra.mxu0 0.0
    %374 = vmatprep.subr.mxu0 0.0
    %375 = vmatpush1.msra.mxu0 0.0
    %376 = vmatprep.subr.mxu0 0.0
    %377 = vmatpush1.msra.mxu0 0.0
    %378 = vmatprep.subr.mxu0 0.0
    %379 = vmatpush1.msra.mxu0 0.0
    %380 = vmatprep.subr.mxu0 0.0
    %381 = vmatpush1.msra.mxu0 0.0
    %382 = vmatprep.subr.mxu0 0.0
    %383 = vmatpush1.msra.mxu0 0.0
    %384 = vmatprep.subr.mxu0 0.0
    %385 = vmatpush1.msra.mxu0 0.0
    %386 = vmatprep.subr.mxu0 0.0
    %387 = vmatpush1.msra.mxu0 0.0
    %388 = vmatprep.subr.mxu0 0.0
    %389 = vmatpush1.msra.mxu0 0.0
    %390 = vmatprep.subr.mxu0 0.0
    %391 = vmatpush1.msra.mxu0 0.0
    %392 = vmatprep.subr.mxu0 0.0
    %393 = vmatpush1.msra.mxu0 0.0
    %394 = vmatprep.subr.mxu0 0.0
    %395 = vmatpush1.msra.mxu0 0.0
    %396 = vmatprep.subr.mxu0 0.0
    %397 = vmatpush1.msra.mxu0 0.0
    %398 = vmatprep.subr.mxu0 0.0
    %399 = vmatpush1.msra.mxu0 0.0
    %400 = vmatprep.subr.mxu0 0.0
    %401 = vmatpush1.msra.mxu0 0.0
    %402 = vmatprep.subr.mxu0 0.0
    %403 = vmatpush1.msra.mxu0 0.0
    %404 = vmatprep.subr.mxu0 0.0
    %405 = vmatpush1.msra.mxu0 0.0
    %406 = vmatprep.subr.mxu0 0.0
    %407 = vmatpush1.msra.mxu0 0.0
    %408 = vmatprep.subr.mxu0 0.0
    %409 = vmatpush1.msra.mxu0 0.0
    %410 = vmatprep.subr.mxu0 0.0
    %411 = vmatpush1.msra.mxu0 0.0
    %412 = vmatprep.subr.mxu0 0.0
    %413 = vmatpush1.msra.mxu0 0.0
    %414 = vmatprep.subr.mxu0 0.0
    %415 = vmatpush1.msra.mxu0 0.0
    %416 = vmatprep.subr.mxu0 0.0
    %417 = vmatpush1.msra.mxu0 0.0
    %418 = vmatprep.mubr.f32.mxu0 0.0
    %419 = vmatmul.mubr.f32.gmra.mrb[0].mxu0 %v149
    %v420 = vpop.f32.mrb[0].mxu0
    %v421 = vadd.f32 0.0, %v420
    %v422 = vpop.f32.mrb[0].mxu0
    %v423 = vadd.f32 0.0, %v422
    %424 = vmatprep.mubr.f32.mxu0 0.0
    %425 = vmatmul.mubr.f32.gmra.mrb[0].mxu0 %v152
    %v426 = vpop.f32.mrb[0].mxu0
    %v427 = vadd.f32 0.0, %v426
    %v428 = vpop.f32.mrb[0].mxu0
    %v429 = vadd.f32 0.0, %v428
    %430 = vmatprep.mubr.f32.mxu0 0.0
    %431 = vmatmul.mubr.f32.gmra.mrb[0].mxu0 %v155
    %v432 = vpop.f32.mrb[0].mxu0
    %v433 = vadd.f32 0.0, %v432
    %v434 = vpop.f32.mrb[0].mxu0
    %v435 = vadd.f32 0.0, %v434
    %436 = vmatprep.mubr.f32.mxu0 0.0
    %437 = vmatmul.mubr.f32.gmra.mrb[0].mxu0 %v158
    %v438 = vpop.f32.mrb[0].mxu0
    %v439 = vadd.f32 0.0, %v438
    %v440 = vpop.f32.mrb[0].mxu0
    %v441 = vadd.f32 0.0, %v440
    %442 = vdwg.mxu0
    %443 = vmatprep.subr.mxu0 %v174
    %444 = vmatpush1.msra.mxu0 %v172
    %445 = vmatprep.subr.mxu0 0.0
    %446 = vmatpush1.msra.mxu0 0.0
    %447 = vmatprep.subr.mxu0 0.0
    %448 = vmatpush1.msra.mxu0 0.0
    %449 = vmatprep.subr.mxu0 0.0
    %450 = vmatpush1.msra.mxu0 0.0
    %451 = vmatprep.subr.mxu0 0.0
    %452 = vmatpush1.msra.mxu0 0.0
    %453 = vmatprep.subr.mxu0 0.0
    %454 = vmatpush1.msra.mxu0 0.0
    %455 = vmatprep.subr.mxu0 0.0
    %456 = vmatpush1.msra.mxu0 0.0
    %457 = vmatprep.subr.mxu0 0.0
    %458 = vmatpush1.msra.mxu0 0.0
    %459 = vmatprep.subr.mxu0 0.0
    %460 = vmatpush1.msra.mxu0 0.0
    %461 = vmatprep.subr.mxu0 0.0
    %462 = vmatpush1.msra.mxu0 0.0
    %463 = vmatprep.subr.mxu0 0.0
    %464 = vmatpush1.msra.mxu0 0.0
    %465 = vmatprep.subr.mxu0 0.0
    %466 = vmatpush1.msra.mxu0 0.0
    %467 = vmatprep.subr.mxu0 0.0
    %468 = vmatpush1.msra.mxu0 0.0
    %469 = vmatprep.subr.mxu0 0.0
    %470 = vmatpush1.msra.mxu0 0.0
    %471 = vmatprep.subr.mxu0 0.0
    %472 = vmatpush1.msra.mxu0 0.0
    %473 = vmatprep.subr.mxu0 0.0
    %474 = vmatpush1.msra.mxu0 0.0
    %475 = vmatprep.subr.mxu0 0.0
    %476 = vmatpush1.msra.mxu0 0.0
    %477 = vmatprep.subr.mxu0 0.0
    %478 = vmatpush1.msra.mxu0 0.0
    %479 = vmatprep.subr.mxu0 0.0
    %480 = vmatpush1.msra.mxu0 0.0
    %481 = vmatprep.subr.mxu0 0.0
    %482 = vmatpush1.msra.mxu0 0.0
    %483 = vmatprep.subr.mxu0 0.0
    %484 = vmatpush1.msra.mxu0 0.0
    %485 = vmatprep.subr.mxu0 0.0
    %486 = vmatpush1.msra.mxu0 0.0
    %487 = vmatprep.subr.mxu0 0.0
    %488 = vmatpush1.msra.mxu0 0.0
    %489 = vmatprep.subr.mxu0 0.0
    %490 = vmatpush1.msra.mxu0 0.0
    %491 = vmatprep.subr.mxu0 0.0
    %492 = vmatpush1.msra.mxu0 0.0
    %493 = vmatprep.subr.mxu0 0.0
    %494 = vmatpush1.msra.mxu0 0.0
    %495 = vmatprep.subr.mxu0 0.0
    %496 = vmatpush1.msra.mxu0 0.0
    %497 = vmatprep.subr.mxu0 0.0
    %498 = vmatpush1.msra.mxu0 0.0
    %499 = vmatprep.subr.mxu0 0.0
    %500 = vmatpush1.msra.mxu0 0.0
    %501 = vmatprep.subr.mxu0 0.0
    %502 = vmatpush1.msra.mxu0 0.0
    %503 = vmatprep.subr.mxu0 0.0
    %504 = vmatpush1.msra.mxu0 0.0
    %505 = vmatprep.subr.mxu0 0.0
    %506 = vmatpush1.msra.mxu0 0.0
    %507 = vmatprep.mubr.f32.mxu0 0.0
    %508 = vmatmul.mubr.f32.gmra.mrb[0].mxu0 %v149
    %v509 = vpop.f32.mrb[0].mxu0
    %v510 = vadd.f32 0.0, %v509
    %v511 = vpop.f32.mrb[0].mxu0
    %v512 = vadd.f32 0.0, %v511
    %513 = vmatprep.mubr.f32.mxu0 0.0
    %514 = vmatmul.mubr.f32.gmra.mrb[0].mxu0 %v152
    %v515 = vpop.f32.mrb[0].mxu0
    %v516 = vadd.f32 0.0, %v515
    %v517 = vpop.f32.mrb[0].mxu0
    %v518 = vadd.f32 0.0, %v517
    %519 = vmatprep.mubr.f32.mxu0 0.0
    %520 = vmatmul.mubr.f32.gmra.mrb[0].mxu0 %v155
    %v521 = vpop.f32.mrb[0].mxu0
    %v522 = vadd.f32 0.0, %v521
    %v523 = vpop.f32.mrb[0].mxu0
    %v524 = vadd.f32 0.0, %v523
    %525 = vmatprep.mubr.f32.mxu0 0.0
    %526 = vmatmul.mubr.f32.gmra.mrb[0].mxu0 %v158
    %v527 = vpop.f32.mrb[0].mxu0
    %v528 = vadd.f32 0.0, %v527
    %v529 = vpop.f32.mrb[0].mxu0
    %v530 = vadd.f32 0.0, %v529
    %531 = vdwg.mxu0
    %532 = vst [vmem:[#allocation2] sm:$0xff] %v243
    %533 = vst [vmem:[#allocation2 + $0x8] sm:$0xff] %v245
    %534 = vst [vmem:[#allocation2 + $0x10] sm:$0xff] %v332
    %535 = vst [vmem:[#allocation2 + $0x18] sm:$0xff] %v334
    %536 = vst [vmem:[#allocation2 + $0x20] sm:$0xff] %v421
    %537 = vst [vmem:[#allocation2 + $0x28] sm:$0xff] %v423
    %538 = vst [vmem:[#allocation2 + $0x30] sm:$0xff] %v510
    %539 = vst [vmem:[#allocation2 + $0x38] sm:$0xff] %v512
    %540 = vst [vmem:[#allocation2 + $0xd8] sm:$0xff] %v249
    %541 = vst [vmem:[#allocation2 + $0xe0] sm:$0xff] %v251
    %542 = vst [vmem:[#allocation2 + $0xe8] sm:$0xff] %v338
    %543 = vst [vmem:[#allocation2 + $0xf0] sm:$0xff] %v340
    %544 = vst [vmem:[#allocation2 + $0xf8] sm:$0xff] %v427
    %545 = vst [vmem:[#allocation2 + $0x100] sm:$0xff] %v429
    %546 = vst [vmem:[#allocation2 + $0x108] sm:$0xff] %v516
    %547 = vst [vmem:[#allocation2 + $0x110] sm:$0xff] %v518
    %548 = vst [vmem:[#allocation2 + $0x1b0] sm:$0xff] %v255
    %549 = vst [vmem:[#allocation2 + $0x1b8] sm:$0xff] %v257
    %550 = vst [vmem:[#allocation2 + $0x1c0] sm:$0xff] %v344
    %551 = vst [vmem:[#allocation2 + $0x1c8] sm:$0xff] %v346
    %552 = vst [vmem:[#allocation2 + $0x1d0] sm:$0xff] %v433
    %553 = vst [vmem:[#allocation2 + $0x1d8] sm:$0xff] %v435
    %554 = vst [vmem:[#allocation2 + $0x1e0] sm:$0xff] %v522
    %555 = vst [vmem:[#allocation2 + $0x1e8] sm:$0xff] %v524
    %556 = vst [vmem:[#allocation2 + $0x288] sm:$0xff] %v261
    %557 = vst [vmem:[#allocation2 + $0x290] sm:$0xff] %v263
    %558 = vst [vmem:[#allocation2 + $0x298] sm:$0xff] %v350
    %559 = vst [vmem:[#allocation2 + $0x2a0] sm:$0xff] %v352
    %560 = vst [vmem:[#allocation2 + $0x2a8] sm:$0xff] %v439
    %561 = vst [vmem:[#allocation2 + $0x2b0] sm:$0xff] %v441
    %562 = vst [vmem:[#allocation2 + $0x2b8] sm:$0xff] %v528
    %563 = vst [vmem:[#allocation2 + $0x2c0] sm:$0xff] %v530
    %v564 = vld [vmem:[#allocation3 + $0x20] sm:$0xff]
    %v565 = vld [vmem:[#allocation3 + $0x28] sm:$0xff]
    %v566 = vld [vmem:[#allocation3 + $0x30] sm:$0xff]
    %v567 = vld [vmem:[#allocation3 + $0x38] sm:$0xff]
    %v572 = vcombine.high %v564, %v564
    %v573 = vcombine.high %v565, %v565
    %v574 = vcombine.high %v566, %v566
    %v575 = vcombine.high %v567, %v567
    %v576 = vsel %vm52, %v564, 0
    %v578 = vsel %vm52, %v572, 0
    %v580 = vsel %vm52, %v565, 0
    %v582 = vsel %vm52, %v573, 0
    %v584 = vsel %vm52, %v566, 0
    %v586 = vsel %vm52, %v574, 0
    %v588 = vsel %vm52, %v567, 0
    %v590 = vsel %vm52, %v575, 0
    %592 = vmatprep.subr.mxu0 %v578
    %593 = vmatpush1.msra.mxu0 %v576
    %594 = vmatprep.subr.mxu0 0.0
    %595 = vmatpush1.msra.mxu0 0.0
    %596 = vmatprep.subr.mxu0 0.0
    %597 = vmatpush1.msra.mxu0 0.0
    %598 = vmatprep.subr.mxu0 0.0
    %599 = vmatpush1.msra.mxu0 0.0
    %600 = vmatprep.subr.mxu0 0.0
    %601 = vmatpush1.msra.mxu0 0.0
    %602 = vmatprep.subr.mxu0 0.0
    %603 = vmatpush1.msra.mxu0 0.0
    %604 = vmatprep.subr.mxu0 0.0
    %605 = vmatpush1.msra.mxu0 0.0
    %606 = vmatprep.subr.mxu0 0.0
    %607 = vmatpush1.msra.mxu0 0.0
    %608 = vmatprep.subr.mxu0 0.0
    %609 = vmatpush1.msra.mxu0 0.0
    %610 = vmatprep.subr.mxu0 0.0
    %611 = vmatpush1.msra.mxu0 0.0
    %612 = vmatprep.subr.mxu0 0.0
    %613 = vmatpush1.msra.mxu0 0.0
    %614 = vmatprep.subr.mxu0 0.0
    %615 = vmatpush1.msra.mxu0 0.0
    %616 = vmatprep.subr.mxu0 0.0
    %617 = vmatpush1.msra.mxu0 0.0
    %618 = vmatprep.subr.mxu0 0.0
    %619 = vmatpush1.msra.mxu0 0.0
    %620 = vmatprep.subr.mxu0 0.0
    %621 = vmatpush1.msra.mxu0 0.0
    %622 = vmatprep.subr.mxu0 0.0
    %623 = vmatpush1.msra.mxu0 0.0
    %624 = vmatprep.subr.mxu0 0.0
    %625 = vmatpush1.msra.mxu0 0.0
    %626 = vmatprep.subr.mxu0 0.0
    %627 = vmatpush1.msra.mxu0 0.0
    %628 = vmatprep.subr.mxu0 0.0
    %629 = vmatpush1.msra.mxu0 0.0
    %630 = vmatprep.subr.mxu0 0.0
    %631 = vmatpush1.msra.mxu0 0.0
    %632 = vmatprep.subr.mxu0 0.0
    %633 = vmatpush1.msra.mxu0 0.0
    %634 = vmatprep.subr.mxu0 0.0
    %635 = vmatpush1.msra.mxu0 0.0
    %636 = vmatprep.subr.mxu0 0.0
    %637 = vmatpush1.msra.mxu0 0.0
    %638 = vmatprep.subr.mxu0 0.0
    %639 = vmatpush1.msra.mxu0 0.0
    %640 = vmatprep.subr.mxu0 0.0
    %641 = vmatpush1.msra.mxu0 0.0
    %642 = vmatprep.subr.mxu0 0.0
    %643 = vmatpush1.msra.mxu0 0.0
    %644 = vmatprep.subr.mxu0 0.0
    %645 = vmatpush1.msra.mxu0 0.0
    %646 = vmatprep.subr.mxu0 0.0
    %647 = vmatpush1.msra.mxu0 0.0
    %648 = vmatprep.subr.mxu0 0.0
    %649 = vmatpush1.msra.mxu0 0.0
    %650 = vmatprep.subr.mxu0 0.0
    %651 = vmatpush1.msra.mxu0 0.0
    %652 = vmatprep.subr.mxu0 0.0
    %653 = vmatpush1.msra.mxu0 0.0
    %654 = vmatprep.subr.mxu0 0.0
    %655 = vmatpush1.msra.mxu0 0.0
    %656 = vmatprep.mubr.f32.mxu0 0.0
    %657 = vmatmul.mubr.f32.gmra.mrb[0].mxu0 %v149
    %v658 = vpop.f32.mrb[0].mxu0
    %v659 = vadd.f32 0.0, %v658
    %v660 = vpop.f32.mrb[0].mxu0
    %v661 = vadd.f32 0.0, %v660
    %662 = vmatprep.mubr.f32.mxu0 0.0
    %663 = vmatmul.mubr.f32.gmra.mrb[0].mxu0 %v152
    %v664 = vpop.f32.mrb[0].mxu0
    %v665 = vadd.f32 0.0, %v664
    %v666 = vpop.f32.mrb[0].mxu0
    %v667 = vadd.f32 0.0, %v666
    %668 = vmatprep.mubr.f32.mxu0 0.0
    %669 = vmatmul.mubr.f32.gmra.mrb[0].mxu0 %v155
    %v670 = vpop.f32.mrb[0].mxu0
    %v671 = vadd.f32 0.0, %v670
    %v672 = vpop.f32.mrb[0].mxu0
    %v673 = vadd.f32 0.0, %v672
    %674 = vmatprep.mubr.f32.mxu0 0.0
    %675 = vmatmul.mubr.f32.gmra.mrb[0].mxu0 %v158
    %v676 = vpop.f32.mrb[0].mxu0
    %v677 = vadd.f32 0.0, %v676
    %v678 = vpop.f32.mrb[0].mxu0
    %v679 = vadd.f32 0.0, %v678
    %680 = vdwg.mxu0
    %681 = vmatprep.subr.mxu0 %v582
    %682 = vmatpush1.msra.mxu0 %v580
    %683 = vmatprep.subr.mxu0 0.0
    %684 = vmatpush1.msra.mxu0 0.0
    %685 = vmatprep.subr.mxu0 0.0
    %686 = vmatpush1.msra.mxu0 0.0
    %687 = vmatprep.subr.mxu0 0.0
    %688 = vmatpush1.msra.mxu0 0.0
    %689 = vmatprep.subr.mxu0 0.0
    %690 = vmatpush1.msra.mxu0 0.0
    %691 = vmatprep.subr.mxu0 0.0
    %692 = vmatpush1.msra.mxu0 0.0
    %693 = vmatprep.subr.mxu0 0.0
    %694 = vmatpush1.msra.mxu0 0.0
    %695 = vmatprep.subr.mxu0 0.0
    %696 = vmatpush1.msra.mxu0 0.0
    %697 = vmatprep.subr.mxu0 0.0
    %698 = vmatpush1.msra.mxu0 0.0
    %699 = vmatprep.subr.mxu0 0.0
    %700 = vmatpush1.msra.mxu0 0.0
    %701 = vmatprep.subr.mxu0 0.0
    %702 = vmatpush1.msra.mxu0 0.0
    %703 = vmatprep.subr.mxu0 0.0
    %704 = vmatpush1.msra.mxu0 0.0
    %705 = vmatprep.subr.mxu0 0.0
    %706 = vmatpush1.msra.mxu0 0.0
    %707 = vmatprep.subr.mxu0 0.0
    %708 = vmatpush1.msra.mxu0 0.0
    %709 = vmatprep.subr.mxu0 0.0
    %710 = vmatpush1.msra.mxu0 0.0
    %711 = vmatprep.subr.mxu0 0.0
    %712 = vmatpush1.msra.mxu0 0.0
    %713 = vmatprep.subr.mxu0 0.0
    %714 = vmatpush1.msra.mxu0 0.0
    %715 = vmatprep.subr.mxu0 0.0
    %716 = vmatpush1.msra.mxu0 0.0
    %717 = vmatprep.subr.mxu0 0.0
    %718 = vmatpush1.msra.mxu0 0.0
    %719 = vmatprep.subr.mxu0 0.0
    %720 = vmatpush1.msra.mxu0 0.0
    %721 = vmatprep.subr.mxu0 0.0
    %722 = vmatpush1.msra.mxu0 0.0
    %723 = vmatprep.subr.mxu0 0.0
    %724 = vmatpush1.msra.mxu0 0.0
    %725 = vmatprep.subr.mxu0 0.0
    %726 = vmatpush1.msra.mxu0 0.0
    %727 = vmatprep.subr.mxu0 0.0
    %728 = vmatpush1.msra.mxu0 0.0
    %729 = vmatprep.subr.mxu0 0.0
    %730 = vmatpush1.msra.mxu0 0.0
    %731 = vmatprep.subr.mxu0 0.0
    %732 = vmatpush1.msra.mxu0 0.0
    %733 = vmatprep.subr.mxu0 0.0
    %734 = vmatpush1.msra.mxu0 0.0
    %735 = vmatprep.subr.mxu0 0.0
    %736 = vmatpush1.msra.mxu0 0.0
    %737 = vmatprep.subr.mxu0 0.0
    %738 = vmatpush1.msra.mxu0 0.0
    %739 = vmatprep.subr.mxu0 0.0
    %740 = vmatpush1.msra.mxu0 0.0
    %741 = vmatprep.subr.mxu0 0.0
    %742 = vmatpush1.msra.mxu0 0.0
    %743 = vmatprep.subr.mxu0 0.0
    %744 = vmatpush1.msra.mxu0 0.0
    %745 = vmatprep.mubr.f32.mxu0 0.0
    %746 = vmatmul.mubr.f32.gmra.mrb[0].mxu0 %v149
    %v747 = vpop.f32.mrb[0].mxu0
    %v748 = vadd.f32 0.0, %v747
    %v749 = vpop.f32.mrb[0].mxu0
    %v750 = vadd.f32 0.0, %v749
    %751 = vmatprep.mubr.f32.mxu0 0.0
    %752 = vmatmul.mubr.f32.gmra.mrb[0].mxu0 %v152
    %v753 = vpop.f32.mrb[0].mxu0
    %v754 = vadd.f32 0.0, %v753
    %v755 = vpop.f32.mrb[0].mxu0
    %v756 = vadd.f32 0.0, %v755
    %757 = vmatprep.mubr.f32.mxu0 0.0
    %758 = vmatmul.mubr.f32.gmra.mrb[0].mxu0 %v155
    %v759 = vpop.f32.mrb[0].mxu0
    %v760 = vadd.f32 0.0, %v759
    %v761 = vpop.f32.mrb[0].mxu0
    %v762 = vadd.f32 0.0, %v761
    %763 = vmatprep.mubr.f32.mxu0 0.0
    %764 = vmatmul.mubr.f32.gmra.mrb[0].mxu0 %v158
    %v765 = vpop.f32.mrb[0].mxu0
    %v766 = vadd.f32 0.0, %v765
    %v767 = vpop.f32.mrb[0].mxu0
    %v768 = vadd.f32 0.0, %v767
    %769 = vdwg.mxu0
    %770 = vmatprep.subr.mxu0 %v586
    %771 = vmatpush1.msra.mxu0 %v584
    %772 = vmatprep.subr.mxu0 0.0
    %773 = vmatpush1.msra.mxu0 0.0
    %774 = vmatprep.subr.mxu0 0.0
    %775 = vmatpush1.msra.mxu0 0.0
    %776 = vmatprep.subr.mxu0 0.0
    %777 = vmatpush1.msra.mxu0 0.0
    %778 = vmatprep.subr.mxu0 0.0
    %779 = vmatpush1.msra.mxu0 0.0
    %780 = vmatprep.subr.mxu0 0.0
    %781 = vmatpush1.msra.mxu0 0.0
    %782 = vmatprep.subr.mxu0 0.0
    %783 = vmatpush1.msra.mxu0 0.0
    %784 = vmatprep.subr.mxu0 0.0
    %785 = vmatpush1.msra.mxu0 0.0
    %786 = vmatprep.subr.mxu0 0.0
    %787 = vmatpush1.msra.mxu0 0.0
    %788 = vmatprep.subr.mxu0 0.0
    %789 = vmatpush1.msra.mxu0 0.0
    %790 = vmatprep.subr.mxu0 0.0
    %791 = vmatpush1.msra.mxu0 0.0
    %792 = vmatprep.subr.mxu0 0.0
    %793 = vmatpush1.msra.mxu0 0.0
    %794 = vmatprep.subr.mxu0 0.0
    %795 = vmatpush1.msra.mxu0 0.0
    %796 = vmatprep.subr.mxu0 0.0
    %797 = vmatpush1.msra.mxu0 0.0
    %798 = vmatprep.subr.mxu0 0.0
    %799 = vmatpush1.msra.mxu0 0.0
    %800 = vmatprep.subr.mxu0 0.0
    %801 = vmatpush1.msra.mxu0 0.0
    %802 = vmatprep.subr.mxu0 0.0
    %803 = vmatpush1.msra.mxu0 0.0
    %804 = vmatprep.subr.mxu0 0.0
    %805 = vmatpush1.msra.mxu0 0.0
    %806 = vmatprep.subr.mxu0 0.0
    %807 = vmatpush1.msra.mxu0 0.0
    %808 = vmatprep.subr.mxu0 0.0
    %809 = vmatpush1.msra.mxu0 0.0
    %810 = vmatprep.subr.mxu0 0.0
    %811 = vmatpush1.msra.mxu0 0.0
    %812 = vmatprep.subr.mxu0 0.0
    %813 = vmatpush1.msra.mxu0 0.0
    %814 = vmatprep.subr.mxu0 0.0
    %815 = vmatpush1.msra.mxu0 0.0
    %816 = vmatprep.subr.mxu0 0.0
    %817 = vmatpush1.msra.mxu0 0.0
    %818 = vmatprep.subr.mxu0 0.0
    %819 = vmatpush1.msra.mxu0 0.0
    %820 = vmatprep.subr.mxu0 0.0
    %821 = vmatpush1.msra.mxu0 0.0
    %822 = vmatprep.subr.mxu0 0.0
    %823 = vmatpush1.msra.mxu0 0.0
    %824 = vmatprep.subr.mxu0 0.0
    %825 = vmatpush1.msra.mxu0 0.0
    %826 = vmatprep.subr.mxu0 0.0
    %827 = vmatpush1.msra.mxu0 0.0
    %828 = vmatprep.subr.mxu0 0.0
    %829 = vmatpush1.msra.mxu0 0.0
    %830 = vmatprep.subr.mxu0 0.0
    %831 = vmatpush1.msra.mxu0 0.0
    %832 = vmatprep.subr.mxu0 0.0
    %833 = vmatpush1.msra.mxu0 0.0
    %834 = vmatprep.mubr.f32.mxu0 0.0
    %835 = vmatmul.mubr.f32.gmra.mrb[0].mxu0 %v149
    %v836 = vpop.f32.mrb[0].mxu0
    %v837 = vadd.f32 0.0, %v836
    %v838 = vpop.f32.mrb[0].mxu0
    %v839 = vadd.f32 0.0, %v838
    %840 = vmatprep.mubr.f32.mxu0 0.0
    %841 = vmatmul.mubr.f32.gmra.mrb[0].mxu0 %v152
    %v842 = vpop.f32.mrb[0].mxu0
    %v843 = vadd.f32 0.0, %v842
    %v844 = vpop.f32.mrb[0].mxu0
    %v845 = vadd.f32 0.0, %v844
    %846 = vmatprep.mubr.f32.mxu0 0.0
    %847 = vmatmul.mubr.f32.gmra.mrb[0].mxu0 %v155
    %v848 = vpop.f32.mrb[0].mxu0
    %v849 = vadd.f32 0.0, %v848
    %v850 = vpop.f32.mrb[0].mxu0
    %v851 = vadd.f32 0.0, %v850
    %852 = vmatprep.mubr.f32.mxu0 0.0
    %853 = vmatmul.mubr.f32.gmra.mrb[0].mxu0 %v158
    %v854 = vpop.f32.mrb[0].mxu0
    %v855 = vadd.f32 0.0, %v854
    %v856 = vpop.f32.mrb[0].mxu0
    %v857 = vadd.f32 0.0, %v856
    %858 = vdwg.mxu0
    %859 = vmatprep.subr.mxu0 %v590
    %860 = vmatpush1.msra.mxu0 %v588
    %861 = vmatprep.subr.mxu0 0.0
    %862 = vmatpush1.msra.mxu0 0.0
    %863 = vmatprep.subr.mxu0 0.0
    %864 = vmatpush1.msra.mxu0 0.0
    %865 = vmatprep.subr.mxu0 0.0
    %866 = vmatpush1.msra.mxu0 0.0
    %867 = vmatprep.subr.mxu0 0.0
    %868 = vmatpush1.msra.mxu0 0.0
    %869 = vmatprep.subr.mxu0 0.0
    %870 = vmatpush1.msra.mxu0 0.0
    %871 = vmatprep.subr.mxu0 0.0
    %872 = vmatpush1.msra.mxu0 0.0
    %873 = vmatprep.subr.mxu0 0.0
    %874 = vmatpush1.msra.mxu0 0.0
    %875 = vmatprep.subr.mxu0 0.0
    %876 = vmatpush1.msra.mxu0 0.0
    %877 = vmatprep.subr.mxu0 0.0
    %878 = vmatpush1.msra.mxu0 0.0
    %879 = vmatprep.subr.mxu0 0.0
    %880 = vmatpush1.msra.mxu0 0.0
    %881 = vmatprep.subr.mxu0 0.0
    %882 = vmatpush1.msra.mxu0 0.0
    %883 = vmatprep.subr.mxu0 0.0
    %884 = vmatpush1.msra.mxu0 0.0
    %885 = vmatprep.subr.mxu0 0.0
    %886 = vmatpush1.msra.mxu0 0.0
    %887 = vmatprep.subr.mxu0 0.0
    %888 = vmatpush1.msra.mxu0 0.0
    %889 = vmatprep.subr.mxu0 0.0
    %890 = vmatpush1.msra.mxu0 0.0
    %891 = vmatprep.subr.mxu0 0.0
    %892 = vmatpush1.msra.mxu0 0.0
    %893 = vmatprep.subr.mxu0 0.0
    %894 = vmatpush1.msra.mxu0 0.0
    %895 = vmatprep.subr.mxu0 0.0
    %896 = vmatpush1.msra.mxu0 0.0
    %897 = vmatprep.subr.mxu0 0.0
    %898 = vmatpush1.msra.mxu0 0.0
    %899 = vmatprep.subr.mxu0 0.0
    %900 = vmatpush1.msra.mxu0 0.0
    %901 = vmatprep.subr.mxu0 0.0
    %902 = vmatpush1.msra.mxu0 0.0
    %903 = vmatprep.subr.mxu0 0.0
    %904 = vmatpush1.msra.mxu0 0.0
    %905 = vmatprep.subr.mxu0 0.0
    %906 = vmatpush1.msra.mxu0 0.0
    %907 = vmatprep.subr.mxu0 0.0
    %908 = vmatpush1.msra.mxu0 0.0
    %909 = vmatprep.subr.mxu0 0.0
    %910 = vmatpush1.msra.mxu0 0.0
    %911 = vmatprep.subr.mxu0 0.0
    %912 = vmatpush1.msra.mxu0 0.0
    %913 = vmatprep.subr.mxu0 0.0
    %914 = vmatpush1.msra.mxu0 0.0
    %915 = vmatprep.subr.mxu0 0.0
    %916 = vmatpush1.msra.mxu0 0.0
    %917 = vmatprep.subr.mxu0 0.0
    %918 = vmatpush1.msra.mxu0 0.0
    %919 = vmatprep.subr.mxu0 0.0
    %920 = vmatpush1.msra.mxu0 0.0
    %921 = vmatprep.subr.mxu0 0.0
    %922 = vmatpush1.msra.mxu0 0.0
    %923 = vmatprep.mubr.f32.mxu0 0.0
    %924 = vmatmul.mubr.f32.gmra.mrb[0].mxu0 %v149
    %v925 = vpop.f32.mrb[0].mxu0
    %v926 = vadd.f32 0.0, %v925
    %v927 = vpop.f32.mrb[0].mxu0
    %v928 = vadd.f32 0.0, %v927
    %929 = vmatprep.mubr.f32.mxu0 0.0
    %930 = vmatmul.mubr.f32.gmra.mrb[0].mxu0 %v152
    %v931 = vpop.f32.mrb[0].mxu0
    %v932 = vadd.f32 0.0, %v931
    %v933 = vpop.f32.mrb[0].mxu0
    %v934 = vadd.f32 0.0, %v933
    %935 = vmatprep.mubr.f32.mxu0 0.0
    %936 = vmatmul.mubr.f32.gmra.mrb[0].mxu0 %v155
    %v937 = vpop.f32.mrb[0].mxu0
    %v938 = vadd.f32 0.0, %v937
    %v939 = vpop.f32.mrb[0].mxu0
    %v940 = vadd.f32 0.0, %v939
    %941 = vmatprep.mubr.f32.mxu0 0.0
    %942 = vmatmul.mubr.f32.gmra.mrb[0].mxu0 %v158
    %v943 = vpop.f32.mrb[0].mxu0
    %v944 = vadd.f32 0.0, %v943
    %v945 = vpop.f32.mrb[0].mxu0
    %v946 = vadd.f32 0.0, %v945
    %947 = vdwg.mxu0
    %948 = vst [vmem:[#allocation2 + $0x40] sm:$0xff] %v659
    %949 = vst [vmem:[#allocation2 + $0x48] sm:$0xff] %v661
    %950 = vst [vmem:[#allocation2 + $0x50] sm:$0xff] %v748
    %951 = vst [vmem:[#allocation2 + $0x58] sm:$0xff] %v750
    %952 = vst [vmem:[#allocation2 + $0x60] sm:$0xff] %v837
    %953 = vst [vmem:[#allocation2 + $0x68] sm:$0xff] %v839
    %954 = vst [vmem:[#allocation2 + $0x70] sm:$0xff] %v926
    %955 = vst [vmem:[#allocation2 + $0x78] sm:$0xff] %v928
    %956 = vst [vmem:[#allocation2 + $0x118] sm:$0xff] %v665
    %957 = vst [vmem:[#allocation2 + $0x120] sm:$0xff] %v667
    %958 = vst [vmem:[#allocation2 + $0x128] sm:$0xff] %v754
    %959 = vst [vmem:[#allocation2 + $0x130] sm:$0xff] %v756
    %960 = vst [vmem:[#allocation2 + $0x138] sm:$0xff] %v843
    %961 = vst [vmem:[#allocation2 + $0x140] sm:$0xff] %v845
    %962 = vst [vmem:[#allocation2 + $0x148] sm:$0xff] %v932
    %963 = vst [vmem:[#allocation2 + $0x150] sm:$0xff] %v934
    %964 = vst [vmem:[#allocation2 + $0x1f0] sm:$0xff] %v671
    %965 = vst [vmem:[#allocation2 + $0x1f8] sm:$0xff] %v673
    %966 = vst [vmem:[#allocation2 + $0x200] sm:$0xff] %v760
    %967 = vst [vmem:[#allocation2 + $0x208] sm:$0xff] %v762
    %968 = vst [vmem:[#allocation2 + $0x210] sm:$0xff] %v849
    %969 = vst [vmem:[#allocation2 + $0x218] sm:$0xff] %v851
    %970 = vst [vmem:[#allocation2 + $0x220] sm:$0xff] %v938
    %971 = vst [vmem:[#allocation2 + $0x228] sm:$0xff] %v940
    %972 = vst [vmem:[#allocation2 + $0x2c8] sm:$0xff] %v677
    %973 = vst [vmem:[#allocation2 + $0x2d0] sm:$0xff] %v679
    %974 = vst [vmem:[#allocation2 + $0x2d8] sm:$0xff] %v766
    %975 = vst [vmem:[#allocation2 + $0x2e0] sm:$0xff] %v768
    %976 = vst [vmem:[#allocation2 + $0x2e8] sm:$0xff] %v855
    %977 = vst [vmem:[#allocation2 + $0x2f0] sm:$0xff] %v857
    %978 = vst [vmem:[#allocation2 + $0x2f8] sm:$0xff] %v944
    %979 = vst [vmem:[#allocation2 + $0x300] sm:$0xff] %v946
    %v980 = vld [vmem:[#allocation3 + $0x40] sm:$0xff]
    %v981 = vld [vmem:[#allocation3 + $0x48] sm:$0xff]
    %v982 = vld [vmem:[#allocation3 + $0x50] sm:$0xff]
    %v983 = vld [vmem:[#allocation3 + $0x58] sm:$0xff]
    %v988 = vcombine.high %v980, %v980
    %v989 = vcombine.high %v981, %v981
    %v990 = vcombine.high %v982, %v982
    %v991 = vcombine.high %v983, %v983
    %v992 = vsel %vm52, %v980, 0
    %v994 = vsel %vm52, %v988, 0
    %v996 = vsel %vm52, %v981, 0
    %v998 = vsel %vm52, %v989, 0
    %v1000 = vsel %vm52, %v982, 0
    %v1002 = vsel %vm52, %v990, 0
    %v1004 = vsel %vm52, %v983, 0
    %v1006 = vsel %vm52, %v991, 0
    %1008 = vmatprep.subr.mxu0 %v994
    %1009 = vmatpush1.msra.mxu0 %v992
    %1010 = vmatprep.subr.mxu0 0.0
    %1011 = vmatpush1.msra.mxu0 0.0
    %1012 = vmatprep.subr.mxu0 0.0
    %1013 = vmatpush1.msra.mxu0 0.0
    %1014 = vmatprep.subr.mxu0 0.0
    %1015 = vmatpush1.msra.mxu0 0.0
    %1016 = vmatprep.subr.mxu0 0.0
    %1017 = vmatpush1.msra.mxu0 0.0
    %1018 = vmatprep.subr.mxu0 0.0
    %1019 = vmatpush1.msra.mxu0 0.0
    %1020 = vmatprep.subr.mxu0 0.0
    %1021 = vmatpush1.msra.mxu0 0.0
    %1022 = vmatprep.subr.mxu0 0.0
    %1023 = vmatpush1.msra.mxu0 0.0
    %1024 = vmatprep.subr.mxu0 0.0
    %1025 = vmatpush1.msra.mxu0 0.0
    %1026 = vmatprep.subr.mxu0 0.0
    %1027 = vmatpush1.msra.mxu0 0.0
    %1028 = vmatprep.subr.mxu0 0.0
    %1029 = vmatpush1.msra.mxu0 0.0
    %1030 = vmatprep.subr.mxu0 0.0
    %1031 = vmatpush1.msra.mxu0 0.0
    %1032 = vmatprep.subr.mxu0 0.0
    %1033 = vmatpush1.msra.mxu0 0.0
    %1034 = vmatprep.subr.mxu0 0.0
    %1035 = vmatpush1.msra.mxu0 0.0
    %1036 = vmatprep.subr.mxu0 0.0
    %1037 = vmatpush1.msra.mxu0 0.0
    %1038 = vmatprep.subr.mxu0 0.0
    %1039 = vmatpush1.msra.mxu0 0.0
    %1040 = vmatprep.subr.mxu0 0.0
    %1041 = vmatpush1.msra.mxu0 0.0
    %1042 = vmatprep.subr.mxu0 0.0
    %1043 = vmatpush1.msra.mxu0 0.0
    %1044 = vmatprep.subr.mxu0 0.0
    %1045 = vmatpush1.msra.mxu0 0.0
    %1046 = vmatprep.subr.mxu0 0.0
    %1047 = vmatpush1.msra.mxu0 0.0
    %1048 = vmatprep.subr.mxu0 0.0
    %1049 = vmatpush1.msra.mxu0 0.0
    %1050 = vmatprep.subr.mxu0 0.0
    %1051 = vmatpush1.msra.mxu0 0.0
    %1052 = vmatprep.subr.mxu0 0.0
    %1053 = vmatpush1.msra.mxu0 0.0
    %1054 = vmatprep.subr.mxu0 0.0
    %1055 = vmatpush1.msra.mxu0 0.0
    %1056 = vmatprep.subr.mxu0 0.0
    %1057 = vmatpush1.msra.mxu0 0.0
    %1058 = vmatprep.subr.mxu0 0.0
    %1059 = vmatpush1.msra.mxu0 0.0
    %1060 = vmatprep.subr.mxu0 0.0
    %1061 = vmatpush1.msra.mxu0 0.0
    %1062 = vmatprep.subr.mxu0 0.0
    %1063 = vmatpush1.msra.mxu0 0.0
    %1064 = vmatprep.subr.mxu0 0.0
    %1065 = vmatpush1.msra.mxu0 0.0
    %1066 = vmatprep.subr.mxu0 0.0
    %1067 = vmatpush1.msra.mxu0 0.0
    %1068 = vmatprep.subr.mxu0 0.0
    %1069 = vmatpush1.msra.mxu0 0.0
    %1070 = vmatprep.subr.mxu0 0.0
    %1071 = vmatpush1.msra.mxu0 0.0
    %1072 = vmatprep.mubr.f32.mxu0 0.0
    %1073 = vmatmul.mubr.f32.gmra.mrb[0].mxu0 %v149
    %v1074 = vpop.f32.mrb[0].mxu0
    %v1075 = vadd.f32 0.0, %v1074
    %v1076 = vpop.f32.mrb[0].mxu0
    %v1077 = vadd.f32 0.0, %v1076
    %1078 = vmatprep.mubr.f32.mxu0 0.0
    %1079 = vmatmul.mubr.f32.gmra.mrb[0].mxu0 %v152
    %v1080 = vpop.f32.mrb[0].mxu0
    %v1081 = vadd.f32 0.0, %v1080
    %v1082 = vpop.f32.mrb[0].mxu0
    %v1083 = vadd.f32 0.0, %v1082
    %1084 = vmatprep.mubr.f32.mxu0 0.0
    %1085 = vmatmul.mubr.f32.gmra.mrb[0].mxu0 %v155
    %v1086 = vpop.f32.mrb[0].mxu0
    %v1087 = vadd.f32 0.0, %v1086
    %v1088 = vpop.f32.mrb[0].mxu0
    %v1089 = vadd.f32 0.0, %v1088
    %1090 = vmatprep.mubr.f32.mxu0 0.0
    %1091 = vmatmul.mubr.f32.gmra.mrb[0].mxu0 %v158
    %v1092 = vpop.f32.mrb[0].mxu0
    %v1093 = vadd.f32 0.0, %v1092
    %v1094 = vpop.f32.mrb[0].mxu0
    %v1095 = vadd.f32 0.0, %v1094
    %1096 = vdwg.mxu0
    %1097 = vmatprep.subr.mxu0 %v998
    %1098 = vmatpush1.msra.mxu0 %v996
    %1099 = vmatprep.subr.mxu0 0.0
    %1100 = vmatpush1.msra.mxu0 0.0
    %1101 = vmatprep.subr.mxu0 0.0
    %1102 = vmatpush1.msra.mxu0 0.0
    %1103 = vmatprep.subr.mxu0 0.0
    %1104 = vmatpush1.msra.mxu0 0.0
    %1105 = vmatprep.subr.mxu0 0.0
    %1106 = vmatpush1.msra.mxu0 0.0
    %1107 = vmatprep.subr.mxu0 0.0
    %1108 = vmatpush1.msra.mxu0 0.0
    %1109 = vmatprep.subr.mxu0 0.0
    %1110 = vmatpush1.msra.mxu0 0.0
    %1111 = vmatprep.subr.mxu0 0.0
    %1112 = vmatpush1.msra.mxu0 0.0
    %1113 = vmatprep.subr.mxu0 0.0
    %1114 = vmatpush1.msra.mxu0 0.0
    %1115 = vmatprep.subr.mxu0 0.0
    %1116 = vmatpush1.msra.mxu0 0.0
    %1117 = vmatprep.subr.mxu0 0.0
    %1118 = vmatpush1.msra.mxu0 0.0
    %1119 = vmatprep.subr.mxu0 0.0
    %1120 = vmatpush1.msra.mxu0 0.0
    %1121 = vmatprep.subr.mxu0 0.0
    %1122 = vmatpush1.msra.mxu0 0.0
    %1123 = vmatprep.subr.mxu0 0.0
    %1124 = vmatpush1.msra.mxu0 0.0
    %1125 = vmatprep.subr.mxu0 0.0
    %1126 = vmatpush1.msra.mxu0 0.0
    %1127 = vmatprep.subr.mxu0 0.0
    %1128 = vmatpush1.msra.mxu0 0.0
    %1129 = vmatprep.subr.mxu0 0.0
    %1130 = vmatpush1.msra.mxu0 0.0
    %1131 = vmatprep.subr.mxu0 0.0
    %1132 = vmatpush1.msra.mxu0 0.0
    %1133 = vmatprep.subr.mxu0 0.0
    %1134 = vmatpush1.msra.mxu0 0.0
    %1135 = vmatprep.subr.mxu0 0.0
    %1136 = vmatpush1.msra.mxu0 0.0
    %1137 = vmatprep.subr.mxu0 0.0
    %1138 = vmatpush1.msra.mxu0 0.0
    %1139 = vmatprep.subr.mxu0 0.0
    %1140 = vmatpush1.msra.mxu0 0.0
    %1141 = vmatprep.subr.mxu0 0.0
    %1142 = vmatpush1.msra.mxu0 0.0
    %1143 = vmatprep.subr.mxu0 0.0
    %1144 = vmatpush1.msra.mxu0 0.0
    %1145 = vmatprep.subr.mxu0 0.0
    %1146 = vmatpush1.msra.mxu0 0.0
    %1147 = vmatprep.subr.mxu0 0.0
    %1148 = vmatpush1.msra.mxu0 0.0
    %1149 = vmatprep.subr.mxu0 0.0
    %1150 = vmatpush1.msra.mxu0 0.0
    %1151 = vmatprep.subr.mxu0 0.0
    %1152 = vmatpush1.msra.mxu0 0.0
    %1153 = vmatprep.subr.mxu0 0.0
    %1154 = vmatpush1.msra.mxu0 0.0
    %1155 = vmatprep.subr.mxu0 0.0
    %1156 = vmatpush1.msra.mxu0 0.0
    %1157 = vmatprep.subr.mxu0 0.0
    %1158 = vmatpush1.msra.mxu0 0.0
    %1159 = vmatprep.subr.mxu0 0.0
    %1160 = vmatpush1.msra.mxu0 0.0
    %1161 = vmatprep.mubr.f32.mxu0 0.0
    %1162 = vmatmul.mubr.f32.gmra.mrb[0].mxu0 %v149
    %v1163 = vpop.f32.mrb[0].mxu0
    %v1164 = vadd.f32 0.0, %v1163
    %v1165 = vpop.f32.mrb[0].mxu0
    %v1166 = vadd.f32 0.0, %v1165
    %1167 = vmatprep.mubr.f32.mxu0 0.0
    %1168 = vmatmul.mubr.f32.gmra.mrb[0].mxu0 %v152
    %v1169 = vpop.f32.mrb[0].mxu0
    %v1170 = vadd.f32 0.0, %v1169
    %v1171 = vpop.f32.mrb[0].mxu0
    %v1172 = vadd.f32 0.0, %v1171
    %1173 = vmatprep.mubr.f32.mxu0 0.0
    %1174 = vmatmul.mubr.f32.gmra.mrb[0].mxu0 %v155
    %v1175 = vpop.f32.mrb[0].mxu0
    %v1176 = vadd.f32 0.0, %v1175
    %v1177 = vpop.f32.mrb[0].mxu0
    %v1178 = vadd.f32 0.0, %v1177
    %1179 = vmatprep.mubr.f32.mxu0 0.0
    %1180 = vmatmul.mubr.f32.gmra.mrb[0].mxu0 %v158
    %v1181 = vpop.f32.mrb[0].mxu0
    %v1182 = vadd.f32 0.0, %v1181
    %v1183 = vpop.f32.mrb[0].mxu0
    %v1184 = vadd.f32 0.0, %v1183
    %1185 = vdwg.mxu0
    %1186 = vmatprep.subr.mxu0 %v1002
    %1187 = vmatpush1.msra.mxu0 %v1000
    %1188 = vmatprep.subr.mxu0 0.0
    %1189 = vmatpush1.msra.mxu0 0.0
    %1190 = vmatprep.subr.mxu0 0.0
    %1191 = vmatpush1.msra.mxu0 0.0
    %1192 = vmatprep.subr.mxu0 0.0
    %1193 = vmatpush1.msra.mxu0 0.0
    %1194 = vmatprep.subr.mxu0 0.0
    %1195 = vmatpush1.msra.mxu0 0.0
    %1196 = vmatprep.subr.mxu0 0.0
    %1197 = vmatpush1.msra.mxu0 0.0
    %1198 = vmatprep.subr.mxu0 0.0
    %1199 = vmatpush1.msra.mxu0 0.0
    %1200 = vmatprep.subr.mxu0 0.0
    %1201 = vmatpush1.msra.mxu0 0.0
    %1202 = vmatprep.subr.mxu0 0.0
    %1203 = vmatpush1.msra.mxu0 0.0
    %1204 = vmatprep.subr.mxu0 0.0
    %1205 = vmatpush1.msra.mxu0 0.0
    %1206 = vmatprep.subr.mxu0 0.0
    %1207 = vmatpush1.msra.mxu0 0.0
    %1208 = vmatprep.subr.mxu0 0.0
    %1209 = vmatpush1.msra.mxu0 0.0
    %1210 = vmatprep.subr.mxu0 0.0
    %1211 = vmatpush1.msra.mxu0 0.0
    %1212 = vmatprep.subr.mxu0 0.0
    %1213 = vmatpush1.msra.mxu0 0.0
    %1214 = vmatprep.subr.mxu0 0.0
    %1215 = vmatpush1.msra.mxu0 0.0
    %1216 = vmatprep.subr.mxu0 0.0
    %1217 = vmatpush1.msra.mxu0 0.0
    %1218 = vmatprep.subr.mxu0 0.0
    %1219 = vmatpush1.msra.mxu0 0.0
    %1220 = vmatprep.subr.mxu0 0.0
    %1221 = vmatpush1.msra.mxu0 0.0
    %1222 = vmatprep.subr.mxu0 0.0
    %1223 = vmatpush1.msra.mxu0 0.0
    %1224 = vmatprep.subr.mxu0 0.0
    %1225 = vmatpush1.msra.mxu0 0.0
    %1226 = vmatprep.subr.mxu0 0.0
    %1227 = vmatpush1.msra.mxu0 0.0
    %1228 = vmatprep.subr.mxu0 0.0
    %1229 = vmatpush1.msra.mxu0 0.0
    %1230 = vmatprep.subr.mxu0 0.0
    %1231 = vmatpush1.msra.mxu0 0.0
    %1232 = vmatprep.subr.mxu0 0.0
    %1233 = vmatpush1.msra.mxu0 0.0
    %1234 = vmatprep.subr.mxu0 0.0
    %1235 = vmatpush1.msra.mxu0 0.0
    %1236 = vmatprep.subr.mxu0 0.0
    %1237 = vmatpush1.msra.mxu0 0.0
    %1238 = vmatprep.subr.mxu0 0.0
    %1239 = vmatpush1.msra.mxu0 0.0
    %1240 = vmatprep.subr.mxu0 0.0
    %1241 = vmatpush1.msra.mxu0 0.0
    %1242 = vmatprep.subr.mxu0 0.0
    %1243 = vmatpush1.msra.mxu0 0.0
    %1244 = vmatprep.subr.mxu0 0.0
    %1245 = vmatpush1.msra.mxu0 0.0
    %1246 = vmatprep.subr.mxu0 0.0
    %1247 = vmatpush1.msra.mxu0 0.0
    %1248 = vmatprep.subr.mxu0 0.0
    %1249 = vmatpush1.msra.mxu0 0.0
    %1250 = vmatprep.mubr.f32.mxu0 0.0
    %1251 = vmatmul.mubr.f32.gmra.mrb[0].mxu0 %v149
    %v1252 = vpop.f32.mrb[0].mxu0
    %v1253 = vadd.f32 0.0, %v1252
    %v1254 = vpop.f32.mrb[0].mxu0
    %v1255 = vadd.f32 0.0, %v1254
    %1256 = vmatprep.mubr.f32.mxu0 0.0
    %1257 = vmatmul.mubr.f32.gmra.mrb[0].mxu0 %v152
    %v1258 = vpop.f32.mrb[0].mxu0
    %v1259 = vadd.f32 0.0, %v1258
    %v1260 = vpop.f32.mrb[0].mxu0
    %v1261 = vadd.f32 0.0, %v1260
    %1262 = vmatprep.mubr.f32.mxu0 0.0
    %1263 = vmatmul.mubr.f32.gmra.mrb[0].mxu0 %v155
    %v1264 = vpop.f32.mrb[0].mxu0
    %v1265 = vadd.f32 0.0, %v1264
    %v1266 = vpop.f32.mrb[0].mxu0
    %v1267 = vadd.f32 0.0, %v1266
    %1268 = vmatprep.mubr.f32.mxu0 0.0
    %1269 = vmatmul.mubr.f32.gmra.mrb[0].mxu0 %v158
    %v1270 = vpop.f32.mrb[0].mxu0
    %v1271 = vadd.f32 0.0, %v1270
    %v1272 = vpop.f32.mrb[0].mxu0
    %v1273 = vadd.f32 0.0, %v1272
    %1274 = vdwg.mxu0
    %1275 = vmatprep.subr.mxu0 %v1006
    %1276 = vmatpush1.msra.mxu0 %v1004
    %1277 = vmatprep.subr.mxu0 0.0
    %1278 = vmatpush1.msra.mxu0 0.0
    %1279 = vmatprep.subr.mxu0 0.0
    %1280 = vmatpush1.msra.mxu0 0.0
    %1281 = vmatprep.subr.mxu0 0.0
    %1282 = vmatpush1.msra.mxu0 0.0
    %1283 = vmatprep.subr.mxu0 0.0
    %1284 = vmatpush1.msra.mxu0 0.0
    %1285 = vmatprep.subr.mxu0 0.0
    %1286 = vmatpush1.msra.mxu0 0.0
    %1287 = vmatprep.subr.mxu0 0.0
    %1288 = vmatpush1.msra.mxu0 0.0
    %1289 = vmatprep.subr.mxu0 0.0
    %1290 = vmatpush1.msra.mxu0 0.0
    %1291 = vmatprep.subr.mxu0 0.0
    %1292 = vmatpush1.msra.mxu0 0.0
    %1293 = vmatprep.subr.mxu0 0.0
    %1294 = vmatpush1.msra.mxu0 0.0
    %1295 = vmatprep.subr.mxu0 0.0
    %1296 = vmatpush1.msra.mxu0 0.0
    %1297 = vmatprep.subr.mxu0 0.0
    %1298 = vmatpush1.msra.mxu0 0.0
    %1299 = vmatprep.subr.mxu0 0.0
    %1300 = vmatpush1.msra.mxu0 0.0
    %1301 = vmatprep.subr.mxu0 0.0
    %1302 = vmatpush1.msra.mxu0 0.0
    %1303 = vmatprep.subr.mxu0 0.0
    %1304 = vmatpush1.msra.mxu0 0.0
    %1305 = vmatprep.subr.mxu0 0.0
    %1306 = vmatpush1.msra.mxu0 0.0
    %1307 = vmatprep.subr.mxu0 0.0
    %1308 = vmatpush1.msra.mxu0 0.0
    %1309 = vmatprep.subr.mxu0 0.0
    %1310 = vmatpush1.msra.mxu0 0.0
    %1311 = vmatprep.subr.mxu0 0.0
    %1312 = vmatpush1.msra.mxu0 0.0
    %1313 = vmatprep.subr.mxu0 0.0
    %1314 = vmatpush1.msra.mxu0 0.0
    %1315 = vmatprep.subr.mxu0 0.0
    %1316 = vmatpush1.msra.mxu0 0.0
    %1317 = vmatprep.subr.mxu0 0.0
    %1318 = vmatpush1.msra.mxu0 0.0
    %1319 = vmatprep.subr.mxu0 0.0
    %1320 = vmatpush1.msra.mxu0 0.0
    %1321 = vmatprep.subr.mxu0 0.0
    %1322 = vmatpush1.msra.mxu0 0.0
    %1323 = vmatprep.subr.mxu0 0.0
    %1324 = vmatpush1.msra.mxu0 0.0
    %1325 = vmatprep.subr.mxu0 0.0
    %1326 = vmatpush1.msra.mxu0 0.0
    %1327 = vmatprep.subr.mxu0 0.0
    %1328 = vmatpush1.msra.mxu0 0.0
    %1329 = vmatprep.subr.mxu0 0.0
    %1330 = vmatpush1.msra.mxu0 0.0
    %1331 = vmatprep.subr.mxu0 0.0
    %1332 = vmatpush1.msra.mxu0 0.0
    %1333 = vmatprep.subr.mxu0 0.0
    %1334 = vmatpush1.msra.mxu0 0.0
    %1335 = vmatprep.subr.mxu0 0.0
    %1336 = vmatpush1.msra.mxu0 0.0
    %1337 = vmatprep.subr.mxu0 0.0
    %1338 = vmatpush1.msra.mxu0 0.0
    %1339 = vmatprep.mubr.f32.mxu0 0.0
    %1340 = vmatmul.mubr.f32.gmra.mrb[0].mxu0 %v149
    %v1341 = vpop.f32.mrb[0].mxu0
    %v1342 = vadd.f32 0.0, %v1341
    %v1343 = vpop.f32.mrb[0].mxu0
    %v1344 = vadd.f32 0.0, %v1343
    %1345 = vmatprep.mubr.f32.mxu0 0.0
    %1346 = vmatmul.mubr.f32.gmra.mrb[0].mxu0 %v152
    %v1347 = vpop.f32.mrb[0].mxu0
    %v1348 = vadd.f32 0.0, %v1347
    %v1349 = vpop.f32.mrb[0].mxu0
    %v1350 = vadd.f32 0.0, %v1349
    %1351 = vmatprep.mubr.f32.mxu0 0.0
    %1352 = vmatmul.mubr.f32.gmra.mrb[0].mxu0 %v155
    %v1353 = vpop.f32.mrb[0].mxu0
    %v1354 = vadd.f32 0.0, %v1353
    %v1355 = vpop.f32.mrb[0].mxu0
    %v1356 = vadd.f32 0.0, %v1355
    %1357 = vmatprep.mubr.f32.mxu0 0.0
    %1358 = vmatmul.mubr.f32.gmra.mrb[0].mxu0 %v158
    %v1359 = vpop.f32.mrb[0].mxu0
    %v1360 = vadd.f32 0.0, %v1359
    %v1361 = vpop.f32.mrb[0].mxu0
    %v1362 = vadd.f32 0.0, %v1361
    %1363 = vdwg.mxu0
    %1364 = vst [vmem:[#allocation2 + $0x80] sm:$0xff] %v1075
    %1365 = vst [vmem:[#allocation2 + $0x88] sm:$0xff] %v1077
    %1366 = vst [vmem:[#allocation2 + $0x90] sm:$0xff] %v1164
    %1367 = vst [vmem:[#allocation2 + $0x98] sm:$0xff] %v1166
    %1368 = vst [vmem:[#allocation2 + $0xa0] sm:$0xff] %v1253
    %1369 = vst [vmem:[#allocation2 + $0xa8] sm:$0xff] %v1255
    %1370 = vst [vmem:[#allocation2 + $0xb0] sm:$0xff] %v1342
    %1371 = vst [vmem:[#allocation2 + $0xb8] sm:$0xff] %v1344
    %1372 = vst [vmem:[#allocation2 + $0x158] sm:$0xff] %v1081
    %1373 = vst [vmem:[#allocation2 + $0x160] sm:$0xff] %v1083
    %1374 = vst [vmem:[#allocation2 + $0x168] sm:$0xff] %v1170
    %1375 = vst [vmem:[#allocation2 + $0x170] sm:$0xff] %v1172
    %1376 = vst [vmem:[#allocation2 + $0x178] sm:$0xff] %v1259
    %1377 = vst [vmem:[#allocation2 + $0x180] sm:$0xff] %v1261
    %1378 = vst [vmem:[#allocation2 + $0x188] sm:$0xff] %v1348
    %1379 = vst [vmem:[#allocation2 + $0x190] sm:$0xff] %v1350
    %1380 = vst [vmem:[#allocation2 + $0x230] sm:$0xff] %v1087
    %1381 = vst [vmem:[#allocation2 + $0x238] sm:$0xff] %v1089
    %1382 = vst [vmem:[#allocation2 + $0x240] sm:$0xff] %v1176
    %1383 = vst [vmem:[#allocation2 + $0x248] sm:$0xff] %v1178
    %1384 = vst [vmem:[#allocation2 + $0x250] sm:$0xff] %v1265
    %1385 = vst [vmem:[#allocation2 + $0x258] sm:$0xff] %v1267
    %1386 = vst [vmem:[#allocation2 + $0x260] sm:$0xff] %v1354
    %1387 = vst [vmem:[#allocation2 + $0x268] sm:$0xff] %v1356
    %1388 = vst [vmem:[#allocation2 + $0x308] sm:$0xff] %v1093
    %1389 = vst [vmem:[#allocation2 + $0x310] sm:$0xff] %v1095
    %1390 = vst [vmem:[#allocation2 + $0x318] sm:$0xff] %v1182
    %1391 = vst [vmem:[#allocation2 + $0x320] sm:$0xff] %v1184
    %1392 = vst [vmem:[#allocation2 + $0x328] sm:$0xff] %v1271
    %1393 = vst [vmem:[#allocation2 + $0x330] sm:$0xff] %v1273
    %1394 = vst [vmem:[#allocation2 + $0x338] sm:$0xff] %v1360
    %1395 = vst [vmem:[#allocation2 + $0x340] sm:$0xff] %v1362
    %v1396 = vld [vmem:[#allocation3 + $0x60] sm:$0xff]
    %v1397 = vld [vmem:[#allocation3 + $0x68] sm:$0xf]
    %v1400 = vcombine.high %v1396, %v1396
    %v1401 = vsel %vm52, %v1396, 0
    %v1403 = vsel %vm52, %v1400, 0
    %v1405 = vsel %vm52, %v1397, 0
    %1407 = vmatprep.subr.mxu0 %v1403
    %1408 = vmatpush1.msra.mxu0 %v1401
    %1409 = vmatprep.subr.mxu0 0.0
    %1410 = vmatpush1.msra.mxu0 0.0
    %1411 = vmatprep.subr.mxu0 0.0
    %1412 = vmatpush1.msra.mxu0 0.0
    %1413 = vmatprep.subr.mxu0 0.0
    %1414 = vmatpush1.msra.mxu0 0.0
    %1415 = vmatprep.subr.mxu0 0.0
    %1416 = vmatpush1.msra.mxu0 0.0
    %1417 = vmatprep.subr.mxu0 0.0
    %1418 = vmatpush1.msra.mxu0 0.0
    %1419 = vmatprep.subr.mxu0 0.0
    %1420 = vmatpush1.msra.mxu0 0.0
    %1421 = vmatprep.subr.mxu0 0.0
    %1422 = vmatpush1.msra.mxu0 0.0
    %1423 = vmatprep.subr.mxu0 0.0
    %1424 = vmatpush1.msra.mxu0 0.0
    %1425 = vmatprep.subr.mxu0 0.0
    %1426 = vmatpush1.msra.mxu0 0.0
    %1427 = vmatprep.subr.mxu0 0.0
    %1428 = vmatpush1.msra.mxu0 0.0
    %1429 = vmatprep.subr.mxu0 0.0
    %1430 = vmatpush1.msra.mxu0 0.0
    %1431 = vmatprep.subr.mxu0 0.0
    %1432 = vmatpush1.msra.mxu0 0.0
    %1433 = vmatprep.subr.mxu0 0.0
    %1434 = vmatpush1.msra.mxu0 0.0
    %1435 = vmatprep.subr.mxu0 0.0
    %1436 = vmatpush1.msra.mxu0 0.0
    %1437 = vmatprep.subr.mxu0 0.0
    %1438 = vmatpush1.msra.mxu0 0.0
    %1439 = vmatprep.subr.mxu0 0.0
    %1440 = vmatpush1.msra.mxu0 0.0
    %1441 = vmatprep.subr.mxu0 0.0
    %1442 = vmatpush1.msra.mxu0 0.0
    %1443 = vmatprep.subr.mxu0 0.0
    %1444 = vmatpush1.msra.mxu0 0.0
    %1445 = vmatprep.subr.mxu0 0.0
    %1446 = vmatpush1.msra.mxu0 0.0
    %1447 = vmatprep.subr.mxu0 0.0
    %1448 = vmatpush1.msra.mxu0 0.0
    %1449 = vmatprep.subr.mxu0 0.0
    %1450 = vmatpush1.msra.mxu0 0.0
    %1451 = vmatprep.subr.mxu0 0.0
    %1452 = vmatpush1.msra.mxu0 0.0
    %1453 = vmatprep.subr.mxu0 0.0
    %1454 = vmatpush1.msra.mxu0 0.0
    %1455 = vmatprep.subr.mxu0 0.0
    %1456 = vmatpush1.msra.mxu0 0.0
    %1457 = vmatprep.subr.mxu0 0.0
    %1458 = vmatpush1.msra.mxu0 0.0
    %1459 = vmatprep.subr.mxu0 0.0
    %1460 = vmatpush1.msra.mxu0 0.0
    %1461 = vmatprep.subr.mxu0 0.0
    %1462 = vmatpush1.msra.mxu0 0.0
    %1463 = vmatprep.subr.mxu0 0.0
    %1464 = vmatpush1.msra.mxu0 0.0
    %1465 = vmatprep.subr.mxu0 0.0
    %1466 = vmatpush1.msra.mxu0 0.0
    %1467 = vmatprep.subr.mxu0 0.0
    %1468 = vmatpush1.msra.mxu0 0.0
    %1469 = vmatprep.subr.mxu0 0.0
    %1470 = vmatpush1.msra.mxu0 0.0
    %1471 = vmatprep.mubr.f32.mxu0 0.0
    %1472 = vmatmul.mubr.f32.gmra.mrb[0].mxu0 %v149
    %v1473 = vpop.f32.mrb[0].mxu0
    %v1474 = vadd.f32 0.0, %v1473
    %v1475 = vpop.f32.mrb[0].mxu0
    %v1476 = vadd.f32 0.0, %v1475
    %1477 = vmatprep.mubr.f32.mxu0 0.0
    %1478 = vmatmul.mubr.f32.gmra.mrb[0].mxu0 %v152
    %v1479 = vpop.f32.mrb[0].mxu0
    %v1480 = vadd.f32 0.0, %v1479
    %v1481 = vpop.f32.mrb[0].mxu0
    %v1482 = vadd.f32 0.0, %v1481
    %1483 = vmatprep.mubr.f32.mxu0 0.0
    %1484 = vmatmul.mubr.f32.gmra.mrb[0].mxu0 %v155
    %v1485 = vpop.f32.mrb[0].mxu0
    %v1486 = vadd.f32 0.0, %v1485
    %v1487 = vpop.f32.mrb[0].mxu0
    %v1488 = vadd.f32 0.0, %v1487
    %1489 = vmatprep.mubr.f32.mxu0 0.0
    %1490 = vmatmul.mubr.f32.gmra.mrb[0].mxu0 %v158
    %v1491 = vpop.f32.mrb[0].mxu0
    %v1492 = vadd.f32 0.0, %v1491
    %v1493 = vpop.f32.mrb[0].mxu0
    %v1494 = vadd.f32 0.0, %v1493
    %1495 = vdwg.mxu0
    %1496 = vmatprep.subr.mxu0 0.0
    %1497 = vmatpush1.msra.mxu0 %v1405
    %1498 = vmatprep.subr.mxu0 0.0
    %1499 = vmatpush1.msra.mxu0 0.0
    %1500 = vmatprep.subr.mxu0 0.0
    %1501 = vmatpush1.msra.mxu0 0.0
    %1502 = vmatprep.subr.mxu0 0.0
    %1503 = vmatpush1.msra.mxu0 0.0
    %1504 = vmatprep.subr.mxu0 0.0
    %1505 = vmatpush1.msra.mxu0 0.0
    %1506 = vmatprep.subr.mxu0 0.0
    %1507 = vmatpush1.msra.mxu0 0.0
    %1508 = vmatprep.subr.mxu0 0.0
    %1509 = vmatpush1.msra.mxu0 0.0
    %1510 = vmatprep.subr.mxu0 0.0
    %1511 = vmatpush1.msra.mxu0 0.0
    %1512 = vmatprep.subr.mxu0 0.0
    %1513 = vmatpush1.msra.mxu0 0.0
    %1514 = vmatprep.subr.mxu0 0.0
    %1515 = vmatpush1.msra.mxu0 0.0
    %1516 = vmatprep.subr.mxu0 0.0
    %1517 = vmatpush1.msra.mxu0 0.0
    %1518 = vmatprep.subr.mxu0 0.0
    %1519 = vmatpush1.msra.mxu0 0.0
    %1520 = vmatprep.subr.mxu0 0.0
    %1521 = vmatpush1.msra.mxu0 0.0
    %1522 = vmatprep.subr.mxu0 0.0
    %1523 = vmatpush1.msra.mxu0 0.0
    %1524 = vmatprep.subr.mxu0 0.0
    %1525 = vmatpush1.msra.mxu0 0.0
    %1526 = vmatprep.subr.mxu0 0.0
    %1527 = vmatpush1.msra.mxu0 0.0
    %1528 = vmatprep.subr.mxu0 0.0
    %1529 = vmatpush1.msra.mxu0 0.0
    %1530 = vmatprep.subr.mxu0 0.0
    %1531 = vmatpush1.msra.mxu0 0.0
    %1532 = vmatprep.subr.mxu0 0.0
    %1533 = vmatpush1.msra.mxu0 0.0
    %1534 = vmatprep.subr.mxu0 0.0
    %1535 = vmatpush1.msra.mxu0 0.0
    %1536 = vmatprep.subr.mxu0 0.0
    %1537 = vmatpush1.msra.mxu0 0.0
    %1538 = vmatprep.subr.mxu0 0.0
    %1539 = vmatpush1.msra.mxu0 0.0
    %1540 = vmatprep.subr.mxu0 0.0
    %1541 = vmatpush1.msra.mxu0 0.0
    %1542 = vmatprep.subr.mxu0 0.0
    %1543 = vmatpush1.msra.mxu0 0.0
    %1544 = vmatprep.subr.mxu0 0.0
    %1545 = vmatpush1.msra.mxu0 0.0
    %1546 = vmatprep.subr.mxu0 0.0
    %1547 = vmatpush1.msra.mxu0 0.0
    %1548 = vmatprep.subr.mxu0 0.0
    %1549 = vmatpush1.msra.mxu0 0.0
    %1550 = vmatprep.subr.mxu0 0.0
    %1551 = vmatpush1.msra.mxu0 0.0
    %1552 = vmatprep.subr.mxu0 0.0
    %1553 = vmatpush1.msra.mxu0 0.0
    %1554 = vmatprep.subr.mxu0 0.0
    %1555 = vmatpush1.msra.mxu0 0.0
    %1556 = vmatprep.subr.mxu0 0.0
    %1557 = vmatpush1.msra.mxu0 0.0
    %1558 = vmatprep.subr.mxu0 0.0
    %1559 = vmatpush1.msra.mxu0 0.0
    %1560 = vmatprep.mubr.f32.mxu0 0.0
    %1561 = vmatmul.mubr.f32.gmra.mrb[0].mxu0 %v149
    %v1562 = vpop.f32.mrb[0].mxu0
    %v1563 = vadd.f32 0.0, %v1562
    %v1564 = vpop.f32.mrb[0].mxu0
    %1565 = vmatprep.mubr.f32.mxu0 0.0
    %1566 = vmatmul.mubr.f32.gmra.mrb[0].mxu0 %v152
    %v1567 = vpop.f32.mrb[0].mxu0
    %v1568 = vadd.f32 0.0, %v1567
    %v1569 = vpop.f32.mrb[0].mxu0
    %1570 = vmatprep.mubr.f32.mxu0 0.0
    %1571 = vmatmul.mubr.f32.gmra.mrb[0].mxu0 %v155
    %v1572 = vpop.f32.mrb[0].mxu0
    %v1573 = vadd.f32 0.0, %v1572
    %v1574 = vpop.f32.mrb[0].mxu0
    %1575 = vmatprep.mubr.f32.mxu0 0.0
    %1576 = vmatmul.mubr.f32.gmra.mrb[0].mxu0 %v158
    %v1577 = vpop.f32.mrb[0].mxu0
    %v1578 = vadd.f32 0.0, %v1577
    %v1579 = vpop.f32.mrb[0].mxu0
    %1580 = vdwg.mxu0
    %1581 = vst [vmem:[#allocation2 + $0xc0] sm:$0xff] %v1474
    %1582 = vst [vmem:[#allocation2 + $0xc8] sm:$0xff] %v1476
    %1583 = vst [vmem:[#allocation2 + $0xd0] sm:$0xff] %v1563
    %1584 = vst [vmem:[#allocation2 + $0x198] sm:$0xff] %v1480
    %1585 = vst [vmem:[#allocation2 + $0x1a0] sm:$0xff] %v1482
    %1586 = vst [vmem:[#allocation2 + $0x1a8] sm:$0xff] %v1568
    %1587 = vst [vmem:[#allocation2 + $0x270] sm:$0xff] %v1486
    %1588 = vst [vmem:[#allocation2 + $0x278] sm:$0xff] %v1488
    %1589 = vst [vmem:[#allocation2 + $0x280] sm:$0xff] %v1573
    %1590 = vst [vmem:[#allocation2 + $0x348] sm:$0xff] %v1492
    %1591 = vst [vmem:[#allocation2 + $0x350] sm:$0xff] %v1494
    %1592 = vst [vmem:[#allocation2 + $0x358] sm:$0xff] %v1578
    %v1593 = vld [vmem:[#allocation2] sm:$0xff]
    %v1594 = vld [vmem:[#allocation2 + $0xd8] sm:$0xff]
    %v1595 = vmul.f32 %v123, %v1593
    %v1596 = vmul.f32 %v128, %v1594
    %v1597 = vld [vmem:[#allocation2 + $0x8] sm:$0xff]
    %v1598 = vld [vmem:[#allocation2 + $0xe0] sm:$0xff]
    %v1599 = vmul.f32 %v123, %v1597
    %v1600 = vmul.f32 %v128, %v1598
    %v1601 = vmax.f32 %v1595, %v1599
    %v1602 = vmax.f32 %v1596, %v1600
    %v1603 = vld [vmem:[#allocation2 + $0x10] sm:$0xff]
    %v1604 = vld [vmem:[#allocation2 + $0xe8] sm:$0xff]
    %v1605 = vmul.f32 %v123, %v1603
    %v1606 = vmul.f32 %v128, %v1604
    %v1607 = vmax.f32 %v1601, %v1605
    %v1608 = vmax.f32 %v1602, %v1606
    %v1609 = vld [vmem:[#allocation2 + $0x18] sm:$0xff]
    %v1610 = vld [vmem:[#allocation2 + $0xf0] sm:$0xff]
    %v1611 = vmul.f32 %v123, %v1609
    %v1612 = vmul.f32 %v128, %v1610
    %v1613 = vmax.f32 %v1607, %v1611
    %v1614 = vmax.f32 %v1608, %v1612
    %v1615 = vld [vmem:[#allocation2 + $0x20] sm:$0xff]
    %v1616 = vld [vmem:[#allocation2 + $0xf8] sm:$0xff]
    %v1617 = vmul.f32 %v123, %v1615
    %v1618 = vmul.f32 %v128, %v1616
    %v1619 = vmax.f32 %v1613, %v1617
    %v1620 = vmax.f32 %v1614, %v1618
    %v1621 = vld [vmem:[#allocation2 + $0x28] sm:$0xff]
    %v1622 = vld [vmem:[#allocation2 + $0x100] sm:$0xff]
    %v1623 = vmul.f32 %v123, %v1621
    %v1624 = vmul.f32 %v128, %v1622
    %v1625 = vmax.f32 %v1619, %v1623
    %v1626 = vmax.f32 %v1620, %v1624
    %v1627 = vld [vmem:[#allocation2 + $0x30] sm:$0xff]
    %v1628 = vld [vmem:[#allocation2 + $0x108] sm:$0xff]
    %v1629 = vmul.f32 %v123, %v1627
    %v1630 = vmul.f32 %v128, %v1628
    %v1631 = vmax.f32 %v1625, %v1629
    %v1632 = vmax.f32 %v1626, %v1630
    %v1633 = vld [vmem:[#allocation2 + $0x38] sm:$0xff]
    %v1634 = vld [vmem:[#allocation2 + $0x110] sm:$0xff]
    %v1635 = vmul.f32 %v123, %v1633
    %v1636 = vmul.f32 %v128, %v1634
    %v1637 = vmax.f32 %v1631, %v1635
    %v1638 = vmax.f32 %v1632, %v1636
    %v1639 = vld [vmem:[#allocation2 + $0x40] sm:$0xff]
    %v1640 = vld [vmem:[#allocation2 + $0x118] sm:$0xff]
    %v1641 = vmul.f32 %v123, %v1639
    %v1642 = vmul.f32 %v128, %v1640
    %v1643 = vmax.f32 %v1637, %v1641
    %v1644 = vmax.f32 %v1638, %v1642
    %v1645 = vld [vmem:[#allocation2 + $0x48] sm:$0xff]
    %v1646 = vld [vmem:[#allocation2 + $0x120] sm:$0xff]
    %v1647 = vmul.f32 %v123, %v1645
    %v1648 = vmul.f32 %v128, %v1646
    %v1649 = vmax.f32 %v1643, %v1647
    %v1650 = vmax.f32 %v1644, %v1648
    %v1651 = vld [vmem:[#allocation2 + $0x50] sm:$0xff]
    %v1652 = vld [vmem:[#allocation2 + $0x128] sm:$0xff]
    %v1653 = vmul.f32 %v123, %v1651
    %v1654 = vmul.f32 %v128, %v1652
    %v1655 = vmax.f32 %v1649, %v1653
    %v1656 = vmax.f32 %v1650, %v1654
    %v1657 = vld [vmem:[#allocation2 + $0x58] sm:$0xff]
    %v1658 = vld [vmem:[#allocation2 + $0x130] sm:$0xff]
    %v1659 = vmul.f32 %v123, %v1657
    %v1660 = vmul.f32 %v128, %v1658
    %v1661 = vmax.f32 %v1655, %v1659
    %v1662 = vmax.f32 %v1656, %v1660
    %v1663 = vld [vmem:[#allocation2 + $0x60] sm:$0xff]
    %v1664 = vld [vmem:[#allocation2 + $0x138] sm:$0xff]
    %v1665 = vmul.f32 %v123, %v1663
    %v1666 = vmul.f32 %v128, %v1664
    %v1667 = vmax.f32 %v1661, %v1665
    %v1668 = vmax.f32 %v1662, %v1666
    %v1669 = vld [vmem:[#allocation2 + $0x68] sm:$0xff]
    %v1670 = vld [vmem:[#allocation2 + $0x140] sm:$0xff]
    %v1671 = vmul.f32 %v123, %v1669
    %v1672 = vmul.f32 %v128, %v1670
    %v1673 = vmax.f32 %v1667, %v1671
    %v1674 = vmax.f32 %v1668, %v1672
    %v1675 = vld [vmem:[#allocation2 + $0x70] sm:$0xff]
    %v1676 = vld [vmem:[#allocation2 + $0x148] sm:$0xff]
    %v1677 = vmul.f32 %v123, %v1675
    %v1678 = vmul.f32 %v128, %v1676
    %v1679 = vmax.f32 %v1673, %v1677
    %v1680 = vmax.f32 %v1674, %v1678
    %v1681 = vld [vmem:[#allocation2 + $0x78] sm:$0xff]
    %v1682 = vld [vmem:[#allocation2 + $0x150] sm:$0xff]
    %v1683 = vmul.f32 %v123, %v1681
    %v1684 = vmul.f32 %v128, %v1682
    %v1685 = vmax.f32 %v1679, %v1683
    %v1686 = vmax.f32 %v1680, %v1684
    %v1687 = vld [vmem:[#allocation2 + $0x80] sm:$0xff]
    %v1688 = vld [vmem:[#allocation2 + $0x158] sm:$0xff]
    %v1689 = vmul.f32 %v123, %v1687
    %v1690 = vmul.f32 %v128, %v1688
    %v1691 = vmax.f32 %v1685, %v1689
    %v1692 = vmax.f32 %v1686, %v1690
    %v1693 = vld [vmem:[#allocation2 + $0x88] sm:$0xff]
    %v1694 = vld [vmem:[#allocation2 + $0x160] sm:$0xff]
    %v1695 = vmul.f32 %v123, %v1693
    %v1696 = vmul.f32 %v128, %v1694
    %v1697 = vmax.f32 %v1691, %v1695
    %v1698 = vmax.f32 %v1692, %v1696
    %v1699 = vld [vmem:[#allocation2 + $0x90] sm:$0xff]
    %v1700 = vld [vmem:[#allocation2 + $0x168] sm:$0xff]
    %v1701 = vmul.f32 %v123, %v1699
    %v1702 = vmul.f32 %v128, %v1700
    %v1703 = vmax.f32 %v1697, %v1701
    %v1704 = vmax.f32 %v1698, %v1702
    %v1705 = vld [vmem:[#allocation2 + $0x98] sm:$0xff]
    %v1706 = vld [vmem:[#allocation2 + $0x170] sm:$0xff]
    %v1707 = vmul.f32 %v123, %v1705
    %v1708 = vmul.f32 %v128, %v1706
    %v1709 = vmax.f32 %v1703, %v1707
    %v1710 = vmax.f32 %v1704, %v1708
    %v1711 = vld [vmem:[#allocation2 + $0xa0] sm:$0xff]
    %v1712 = vld [vmem:[#allocation2 + $0x178] sm:$0xff]
    %v1713 = vmul.f32 %v123, %v1711
    %v1714 = vmul.f32 %v128, %v1712
    %v1715 = vmax.f32 %v1709, %v1713
    %v1716 = vmax.f32 %v1710, %v1714
    %v1717 = vld [vmem:[#allocation2 + $0xa8] sm:$0xff]
    %v1718 = vld [vmem:[#allocation2 + $0x180] sm:$0xff]
    %v1719 = vmul.f32 %v123, %v1717
    %v1720 = vmul.f32 %v128, %v1718
    %v1721 = vmax.f32 %v1715, %v1719
    %v1722 = vmax.f32 %v1716, %v1720
    %v1723 = vld [vmem:[#allocation2 + $0xb0] sm:$0xff]
    %v1724 = vld [vmem:[#allocation2 + $0x188] sm:$0xff]
    %v1725 = vmul.f32 %v123, %v1723
    %v1726 = vmul.f32 %v128, %v1724
    %v1727 = vmax.f32 %v1721, %v1725
    %v1728 = vmax.f32 %v1722, %v1726
    %v1729 = vld [vmem:[#allocation2 + $0xb8] sm:$0xff]
    %v1730 = vld [vmem:[#allocation2 + $0x190] sm:$0xff]
    %v1731 = vmul.f32 %v123, %v1729
    %v1732 = vmul.f32 %v128, %v1730
    %v1733 = vmax.f32 %v1727, %v1731
    %v1734 = vmax.f32 %v1728, %v1732
    %v1735 = vld [vmem:[#allocation2 + $0xc0] sm:$0xff]
    %v1736 = vld [vmem:[#allocation2 + $0x198] sm:$0xff]
    %v1737 = vmul.f32 %v123, %v1735
    %v1738 = vmul.f32 %v128, %v1736
    %v1739 = vmax.f32 %v1733, %v1737
    %v1740 = vmax.f32 %v1734, %v1738
    %v1741 = vld [vmem:[#allocation2 + $0xc8] sm:$0xff]
    %v1742 = vld [vmem:[#allocation2 + $0x1a0] sm:$0xff]
    %v1743 = vmul.f32 %v123, %v1741
    %v1744 = vmul.f32 %v128, %v1742
    %v1745 = vmax.f32 %v1739, %v1743
    %v1746 = vmax.f32 %v1740, %v1744
    %v1747 = vld [vmem:[#allocation2 + $0xd0] sm:$0xff]
    %v1748 = vld [vmem:[#allocation2 + $0x1a8] sm:$0xff]
    %v1749 = vmul.f32 %v123, %v1747
    %v1750 = vmul.f32 %v128, %v1748
    %v1751 = vmax.f32 %v1745, %v1749
    %v1752 = vmax.f32 %v1746, %v1750
    %v1753 = vld [vmem:[#allocation2 + $0x1b0] sm:$0xff]
    %v1754 = vld [vmem:[#allocation2 + $0x288] sm:$0xff]
    %v1755 = vsub.f32 %v1595, %v1751
    %v1756 = vsub.f32 %v1596, %v1752
    %v1757 = vmul.f32 %v1755, 1.442695
    %v1758 = vpow.pop %v1757
    %v1759 = vmul.f32 %v1756, 1.442695
    %v1760 = vpow.pop %v1759
    %v1761 = vadd.f32 %v1758, 0.0
    %v1762 = vadd.f32 %v1760, 0.0
    %v1763 = vmul.f32 %v1758, %v1753
    %v1764 = vmul.f32 %v1760, %v1754
    %v1765 = vadd.f32 %v1763, 0.0
    %v1766 = vadd.f32 %v1764, 0.0
    %v1767 = vld [vmem:[#allocation2 + $0x1b8] sm:$0xff]
    %v1768 = vld [vmem:[#allocation2 + $0x290] sm:$0xff]
    %v1769 = vsub.f32 %v1599, %v1751
    %v1770 = vsub.f32 %v1600, %v1752
    %v1771 = vmul.f32 %v1769, 1.442695
    %v1772 = vpow.pop %v1771
    %v1773 = vmul.f32 %v1770, 1.442695
    %v1774 = vpow.pop %v1773
    %v1775 = vadd.f32 %v1761, %v1772
    %v1776 = vadd.f32 %v1762, %v1774
    %v1777 = vmul.f32 %v1772, %v1767
    %v1778 = vmul.f32 %v1774, %v1768
    %v1779 = vadd.f32 %v1765, %v1777
    %v1780 = vadd.f32 %v1766, %v1778
    %v1781 = vld [vmem:[#allocation2 + $0x1c0] sm:$0xff]
    %v1782 = vld [vmem:[#allocation2 + $0x298] sm:$0xff]
    %v1783 = vsub.f32 %v1605, %v1751
    %v1784 = vsub.f32 %v1606, %v1752
    %v1785 = vmul.f32 %v1783, 1.442695
    %v1786 = vpow.pop %v1785
    %v1787 = vmul.f32 %v1784, 1.442695
    %v1788 = vpow.pop %v1787
    %v1789 = vadd.f32 %v1775, %v1786
    %v1790 = vadd.f32 %v1776, %v1788
    %v1791 = vmul.f32 %v1786, %v1781
    %v1792 = vmul.f32 %v1788, %v1782
    %v1793 = vadd.f32 %v1779, %v1791
    %v1794 = vadd.f32 %v1780, %v1792
    %v1795 = vld [vmem:[#allocation2 + $0x1c8] sm:$0xff]
    %v1796 = vld [vmem:[#allocation2 + $0x2a0] sm:$0xff]
    %v1797 = vsub.f32 %v1611, %v1751
    %v1798 = vsub.f32 %v1612, %v1752
    %v1799 = vmul.f32 %v1797, 1.442695
    %v1800 = vpow.pop %v1799
    %v1801 = vmul.f32 %v1798, 1.442695
    %v1802 = vpow.pop %v1801
    %v1803 = vadd.f32 %v1789, %v1800
    %v1804 = vadd.f32 %v1790, %v1802
    %v1805 = vmul.f32 %v1800, %v1795
    %v1806 = vmul.f32 %v1802, %v1796
    %v1807 = vadd.f32 %v1793, %v1805
    %v1808 = vadd.f32 %v1794, %v1806
    %v1809 = vld [vmem:[#allocation2 + $0x1d0] sm:$0xff]
    %v1810 = vld [vmem:[#allocation2 + $0x2a8] sm:$0xff]
    %v1811 = vsub.f32 %v1617, %v1751
    %v1812 = vsub.f32 %v1618, %v1752
    %v1813 = vmul.f32 %v1811, 1.442695
    %v1814 = vpow.pop %v1813
    %v1815 = vmul.f32 %v1812, 1.442695
    %v1816 = vpow.pop %v1815
    %v1817 = vadd.f32 %v1803, %v1814
    %v1818 = vadd.f32 %v1804, %v1816
    %v1819 = vmul.f32 %v1814, %v1809
    %v1820 = vmul.f32 %v1816, %v1810
    %v1821 = vadd.f32 %v1807, %v1819
    %v1822 = vadd.f32 %v1808, %v1820
    %v1823 = vld [vmem:[#allocation2 + $0x1d8] sm:$0xff]
    %v1824 = vld [vmem:[#allocation2 + $0x2b0] sm:$0xff]
    %v1825 = vsub.f32 %v1623, %v1751
    %v1826 = vsub.f32 %v1624, %v1752
    %v1827 = vmul.f32 %v1825, 1.442695
    %v1828 = vpow.pop %v1827
    %v1829 = vmul.f32 %v1826, 1.442695
    %v1830 = vpow.pop %v1829
    %v1831 = vadd.f32 %v1817, %v1828
    %v1832 = vadd.f32 %v1818, %v1830
    %v1833 = vmul.f32 %v1828, %v1823
    %v1834 = vmul.f32 %v1830, %v1824
    %v1835 = vadd.f32 %v1821, %v1833
    %v1836 = vadd.f32 %v1822, %v1834
    %v1837 = vld [vmem:[#allocation2 + $0x1e0] sm:$0xff]
    %v1838 = vld [vmem:[#allocation2 + $0x2b8] sm:$0xff]
    %v1839 = vsub.f32 %v1629, %v1751
    %v1840 = vsub.f32 %v1630, %v1752
    %v1841 = vmul.f32 %v1839, 1.442695
    %v1842 = vpow.pop %v1841
    %v1843 = vmul.f32 %v1840, 1.442695
    %v1844 = vpow.pop %v1843
    %v1845 = vadd.f32 %v1831, %v1842
    %v1846 = vadd.f32 %v1832, %v1844
    %v1847 = vmul.f32 %v1842, %v1837
    %v1848 = vmul.f32 %v1844, %v1838
    %v1849 = vadd.f32 %v1835, %v1847
    %v1850 = vadd.f32 %v1836, %v1848
    %v1851 = vld [vmem:[#allocation2 + $0x1e8] sm:$0xff]
    %v1852 = vld [vmem:[#allocation2 + $0x2c0] sm:$0xff]
    %v1853 = vsub.f32 %v1635, %v1751
    %v1854 = vsub.f32 %v1636, %v1752
    %v1855 = vmul.f32 %v1853, 1.442695
    %v1856 = vpow.pop %v1855
    %v1857 = vmul.f32 %v1854, 1.442695
    %v1858 = vpow.pop %v1857
    %v1859 = vadd.f32 %v1845, %v1856
    %v1860 = vadd.f32 %v1846, %v1858
    %v1861 = vmul.f32 %v1856, %v1851
    %v1862 = vmul.f32 %v1858, %v1852
    %v1863 = vadd.f32 %v1849, %v1861
    %v1864 = vadd.f32 %v1850, %v1862
    %v1865 = vld [vmem:[#allocation2 + $0x1f0] sm:$0xff]
    %v1866 = vld [vmem:[#allocation2 + $0x2c8] sm:$0xff]
    %v1867 = vsub.f32 %v1641, %v1751
    %v1868 = vsub.f32 %v1642, %v1752
    %v1869 = vmul.f32 %v1867, 1.442695
    %v1870 = vpow.pop %v1869
    %v1871 = vmul.f32 %v1868, 1.442695
    %v1872 = vpow.pop %v1871
    %v1873 = vadd.f32 %v1859, %v1870
    %v1874 = vadd.f32 %v1860, %v1872
    %v1875 = vmul.f32 %v1870, %v1865
    %v1876 = vmul.f32 %v1872, %v1866
    %v1877 = vadd.f32 %v1863, %v1875
    %v1878 = vadd.f32 %v1864, %v1876
    %v1879 = vld [vmem:[#allocation2 + $0x1f8] sm:$0xff]
    %v1880 = vld [vmem:[#allocation2 + $0x2d0] sm:$0xff]
    %v1881 = vsub.f32 %v1647, %v1751
    %v1882 = vsub.f32 %v1648, %v1752
    %v1883 = vmul.f32 %v1881, 1.442695
    %v1884 = vpow.pop %v1883
    %v1885 = vmul.f32 %v1882, 1.442695
    %v1886 = vpow.pop %v1885
    %v1887 = vadd.f32 %v1873, %v1884
    %v1888 = vadd.f32 %v1874, %v1886
    %v1889 = vmul.f32 %v1884, %v1879
    %v1890 = vmul.f32 %v1886, %v1880
    %v1891 = vadd.f32 %v1877, %v1889
    %v1892 = vadd.f32 %v1878, %v1890
    %v1893 = vld [vmem:[#allocation2 + $0x200] sm:$0xff]
    %v1894 = vld [vmem:[#allocation2 + $0x2d8] sm:$0xff]
    %v1895 = vsub.f32 %v1653, %v1751
    %v1896 = vsub.f32 %v1654, %v1752
    %v1897 = vmul.f32 %v1895, 1.442695
    %v1898 = vpow.pop %v1897
    %v1899 = vmul.f32 %v1896, 1.442695
    %v1900 = vpow.pop %v1899
    %v1901 = vadd.f32 %v1887, %v1898
    %v1902 = vadd.f32 %v1888, %v1900
    %v1903 = vmul.f32 %v1898, %v1893
    %v1904 = vmul.f32 %v1900, %v1894
    %v1905 = vadd.f32 %v1891, %v1903
    %v1906 = vadd.f32 %v1892, %v1904
    %v1907 = vld [vmem:[#allocation2 + $0x208] sm:$0xff]
    %v1908 = vld [vmem:[#allocation2 + $0x2e0] sm:$0xff]
    %v1909 = vsub.f32 %v1659, %v1751
    %v1910 = vsub.f32 %v1660, %v1752
    %v1911 = vmul.f32 %v1909, 1.442695
    %v1912 = vpow.pop %v1911
    %v1913 = vmul.f32 %v1910, 1.442695
    %v1914 = vpow.pop %v1913
    %v1915 = vadd.f32 %v1901, %v1912
    %v1916 = vadd.f32 %v1902, %v1914
    %v1917 = vmul.f32 %v1912, %v1907
    %v1918 = vmul.f32 %v1914, %v1908
    %v1919 = vadd.f32 %v1905, %v1917
    %v1920 = vadd.f32 %v1906, %v1918
    %v1921 = vld [vmem:[#allocation2 + $0x210] sm:$0xff]
    %v1922 = vld [vmem:[#allocation2 + $0x2e8] sm:$0xff]
    %v1923 = vsub.f32 %v1665, %v1751
    %v1924 = vsub.f32 %v1666, %v1752
    %v1925 = vmul.f32 %v1923, 1.442695
    %v1926 = vpow.pop %v1925
    %v1927 = vmul.f32 %v1924, 1.442695
    %v1928 = vpow.pop %v1927
    %v1929 = vadd.f32 %v1915, %v1926
    %v1930 = vadd.f32 %v1916, %v1928
    %v1931 = vmul.f32 %v1926, %v1921
    %v1932 = vmul.f32 %v1928, %v1922
    %v1933 = vadd.f32 %v1919, %v1931
    %v1934 = vadd.f32 %v1920, %v1932
    %v1935 = vld [vmem:[#allocation2 + $0x218] sm:$0xff]
    %v1936 = vld [vmem:[#allocation2 + $0x2f0] sm:$0xff]
    %v1937 = vsub.f32 %v1671, %v1751
    %v1938 = vsub.f32 %v1672, %v1752
    %v1939 = vmul.f32 %v1937, 1.442695
    %v1940 = vpow.pop %v1939
    %v1941 = vmul.f32 %v1938, 1.442695
    %v1942 = vpow.pop %v1941
    %v1943 = vadd.f32 %v1929, %v1940
    %v1944 = vadd.f32 %v1930, %v1942
    %v1945 = vmul.f32 %v1940, %v1935
    %v1946 = vmul.f32 %v1942, %v1936
    %v1947 = vadd.f32 %v1933, %v1945
    %v1948 = vadd.f32 %v1934, %v1946
    %v1949 = vld [vmem:[#allocation2 + $0x220] sm:$0xff]
    %v1950 = vld [vmem:[#allocation2 + $0x2f8] sm:$0xff]
    %v1951 = vsub.f32 %v1677, %v1751
    %v1952 = vsub.f32 %v1678, %v1752
    %v1953 = vmul.f32 %v1951, 1.442695
    %v1954 = vpow.pop %v1953
    %v1955 = vmul.f32 %v1952, 1.442695
    %v1956 = vpow.pop %v1955
    %v1957 = vadd.f32 %v1943, %v1954
    %v1958 = vadd.f32 %v1944, %v1956
    %v1959 = vmul.f32 %v1954, %v1949
    %v1960 = vmul.f32 %v1956, %v1950
    %v1961 = vadd.f32 %v1947, %v1959
    %v1962 = vadd.f32 %v1948, %v1960
    %v1963 = vld [vmem:[#allocation2 + $0x228] sm:$0xff]
    %v1964 = vld [vmem:[#allocation2 + $0x300] sm:$0xff]
    %v1965 = vsub.f32 %v1683, %v1751
    %v1966 = vsub.f32 %v1684, %v1752
    %v1967 = vmul.f32 %v1965, 1.442695
    %v1968 = vpow.pop %v1967
    %v1969 = vmul.f32 %v1966, 1.442695
    %v1970 = vpow.pop %v1969
    %v1971 = vadd.f32 %v1957, %v1968
    %v1972 = vadd.f32 %v1958, %v1970
    %v1973 = vmul.f32 %v1968, %v1963
    %v1974 = vmul.f32 %v1970, %v1964
    %v1975 = vadd.f32 %v1961, %v1973
    %v1976 = vadd.f32 %v1962, %v1974
    %v1977 = vld [vmem:[#allocation2 + $0x230] sm:$0xff]
    %v1978 = vld [vmem:[#allocation2 + $0x308] sm:$0xff]
    %v1979 = vsub.f32 %v1689, %v1751
    %v1980 = vsub.f32 %v1690, %v1752
    %v1981 = vmul.f32 %v1979, 1.442695
    %v1982 = vpow.pop %v1981
    %v1983 = vmul.f32 %v1980, 1.442695
    %v1984 = vpow.pop %v1983
    %v1985 = vadd.f32 %v1971, %v1982
    %v1986 = vadd.f32 %v1972, %v1984
    %v1987 = vmul.f32 %v1982, %v1977
    %v1988 = vmul.f32 %v1984, %v1978
    %v1989 = vadd.f32 %v1975, %v1987
    %v1990 = vadd.f32 %v1976, %v1988
    %v1991 = vld [vmem:[#allocation2 + $0x238] sm:$0xff]
    %v1992 = vld [vmem:[#allocation2 + $0x310] sm:$0xff]
    %v1993 = vsub.f32 %v1695, %v1751
    %v1994 = vsub.f32 %v1696, %v1752
    %v1995 = vmul.f32 %v1993, 1.442695
    %v1996 = vpow.pop %v1995
    %v1997 = vmul.f32 %v1994, 1.442695
    %v1998 = vpow.pop %v1997
    %v1999 = vadd.f32 %v1985, %v1996
    %v2000 = vadd.f32 %v1986, %v1998
    %v2001 = vmul.f32 %v1996, %v1991
    %v2002 = vmul.f32 %v1998, %v1992
    %v2003 = vadd.f32 %v1989, %v2001
    %v2004 = vadd.f32 %v1990, %v2002
    %v2005 = vld [vmem:[#allocation2 + $0x240] sm:$0xff]
    %v2006 = vld [vmem:[#allocation2 + $0x318] sm:$0xff]
    %v2007 = vsub.f32 %v1701, %v1751
    %v2008 = vsub.f32 %v1702, %v1752
    %v2009 = vmul.f32 %v2007, 1.442695
    %v2010 = vpow.pop %v2009
    %v2011 = vmul.f32 %v2008, 1.442695
    %v2012 = vpow.pop %v2011
    %v2013 = vadd.f32 %v1999, %v2010
    %v2014 = vadd.f32 %v2000, %v2012
    %v2015 = vmul.f32 %v2010, %v2005
    %v2016 = vmul.f32 %v2012, %v2006
    %v2017 = vadd.f32 %v2003, %v2015
    %v2018 = vadd.f32 %v2004, %v2016
    %v2019 = vld [vmem:[#allocation2 + $0x248] sm:$0xff]
    %v2020 = vld [vmem:[#allocation2 + $0x320] sm:$0xff]
    %v2021 = vsub.f32 %v1707, %v1751
    %v2022 = vsub.f32 %v1708, %v1752
    %v2023 = vmul.f32 %v2021, 1.442695
    %v2024 = vpow.pop %v2023
    %v2025 = vmul.f32 %v2022, 1.442695
    %v2026 = vpow.pop %v2025
    %v2027 = vadd.f32 %v2013, %v2024
    %v2028 = vadd.f32 %v2014, %v2026
    %v2029 = vmul.f32 %v2024, %v2019
    %v2030 = vmul.f32 %v2026, %v2020
    %v2031 = vadd.f32 %v2017, %v2029
    %v2032 = vadd.f32 %v2018, %v2030
    %v2033 = vld [vmem:[#allocation2 + $0x250] sm:$0xff]
    %v2034 = vld [vmem:[#allocation2 + $0x328] sm:$0xff]
    %v2035 = vsub.f32 %v1713, %v1751
    %v2036 = vsub.f32 %v1714, %v1752
    %v2037 = vmul.f32 %v2035, 1.442695
    %v2038 = vpow.pop %v2037
    %v2039 = vmul.f32 %v2036, 1.442695
    %v2040 = vpow.pop %v2039
    %v2041 = vadd.f32 %v2027, %v2038
    %v2042 = vadd.f32 %v2028, %v2040
    %v2043 = vmul.f32 %v2038, %v2033
    %v2044 = vmul.f32 %v2040, %v2034
    %v2045 = vadd.f32 %v2031, %v2043
    %v2046 = vadd.f32 %v2032, %v2044
    %v2047 = vld [vmem:[#allocation2 + $0x258] sm:$0xff]
    %v2048 = vld [vmem:[#allocation2 + $0x330] sm:$0xff]
    %v2049 = vsub.f32 %v1719, %v1751
    %v2050 = vsub.f32 %v1720, %v1752
    %v2051 = vmul.f32 %v2049, 1.442695
    %v2052 = vpow.pop %v2051
    %v2053 = vmul.f32 %v2050, 1.442695
    %v2054 = vpow.pop %v2053
    %v2055 = vadd.f32 %v2041, %v2052
    %v2056 = vadd.f32 %v2042, %v2054
    %v2057 = vmul.f32 %v2052, %v2047
    %v2058 = vmul.f32 %v2054, %v2048
    %v2059 = vadd.f32 %v2045, %v2057
    %v2060 = vadd.f32 %v2046, %v2058
    %v2061 = vld [vmem:[#allocation2 + $0x260] sm:$0xff]
    %v2062 = vld [vmem:[#allocation2 + $0x338] sm:$0xff]
    %v2063 = vsub.f32 %v1725, %v1751
    %v2064 = vsub.f32 %v1726, %v1752
    %v2065 = vmul.f32 %v2063, 1.442695
    %v2066 = vpow.pop %v2065
    %v2067 = vmul.f32 %v2064, 1.442695
    %v2068 = vpow.pop %v2067
    %v2069 = vadd.f32 %v2055, %v2066
    %v2070 = vadd.f32 %v2056, %v2068
    %v2071 = vmul.f32 %v2066, %v2061
    %v2072 = vmul.f32 %v2068, %v2062
    %v2073 = vadd.f32 %v2059, %v2071
    %v2074 = vadd.f32 %v2060, %v2072
    %v2075 = vld [vmem:[#allocation2 + $0x268] sm:$0xff]
    %v2076 = vld [vmem:[#allocation2 + $0x340] sm:$0xff]
    %v2077 = vsub.f32 %v1731, %v1751
    %v2078 = vsub.f32 %v1732, %v1752
    %v2079 = vmul.f32 %v2077, 1.442695
    %v2080 = vpow.pop %v2079
    %v2081 = vmul.f32 %v2078, 1.442695
    %v2082 = vpow.pop %v2081
    %v2083 = vadd.f32 %v2069, %v2080
    %v2084 = vadd.f32 %v2070, %v2082
    %v2085 = vmul.f32 %v2080, %v2075
    %v2086 = vmul.f32 %v2082, %v2076
    %v2087 = vadd.f32 %v2073, %v2085
    %v2088 = vadd.f32 %v2074, %v2086
    %v2089 = vld [vmem:[#allocation2 + $0x270] sm:$0xff]
    %v2090 = vld [vmem:[#allocation2 + $0x348] sm:$0xff]
    %v2091 = vsub.f32 %v1737, %v1751
    %v2092 = vsub.f32 %v1738, %v1752
    %v2093 = vmul.f32 %v2091, 1.442695
    %v2094 = vpow.pop %v2093
    %v2095 = vmul.f32 %v2092, 1.442695
    %v2096 = vpow.pop %v2095
    %v2097 = vadd.f32 %v2083, %v2094
    %v2098 = vadd.f32 %v2084, %v2096
    %v2099 = vmul.f32 %v2094, %v2089
    %v2100 = vmul.f32 %v2096, %v2090
    %v2101 = vadd.f32 %v2087, %v2099
    %v2102 = vadd.f32 %v2088, %v2100
    %v2103 = vld [vmem:[#allocation2 + $0x278] sm:$0xff]
    %v2104 = vld [vmem:[#allocation2 + $0x350] sm:$0xff]
    %v2105 = vsub.f32 %v1743, %v1751
    %v2106 = vsub.f32 %v1744, %v1752
    %v2107 = vmul.f32 %v2105, 1.442695
    %v2108 = vpow.pop %v2107
    %v2109 = vmul.f32 %v2106, 1.442695
    %v2110 = vpow.pop %v2109
    %v2111 = vadd.f32 %v2097, %v2108
    %v2112 = vadd.f32 %v2098, %v2110
    %v2113 = vmul.f32 %v2108, %v2103
    %v2114 = vmul.f32 %v2110, %v2104
    %v2115 = vadd.f32 %v2101, %v2113
    %v2116 = vadd.f32 %v2102, %v2114
    %v2117 = vld [vmem:[#allocation2 + $0xd0] sm:$0xff]
    %v2118 = vld [vmem:[#allocation2 + $0x1a8] sm:$0xff]
    %v2119 = vld [vmem:[#allocation2 + $0x280] sm:$0xff]
    %v2120 = vld [vmem:[#allocation2 + $0x358] sm:$0xff]
    %v2121 = vmul.f32 %v123, %v2117
    %v2122 = vmul.f32 %v128, %v2118
    %v2123 = vsub.f32 %v2121, %v1751
    %v2124 = vsub.f32 %v2122, %v1752
    %v2125 = vmul.f32 %v2123, 1.442695
    %v2126 = vpow.pop %v2125
    %v2127 = vmul.f32 %v2124, 1.442695
    %v2128 = vpow.pop %v2127
    %v2129 = vadd.f32 %v2111, %v2126
    %v2130 = vadd.f32 %v2112, %v2128
    %v2131 = vmul.f32 %v2126, %v2119
    %v2132 = vmul.f32 %v2128, %v2120
    %v2133 = vadd.f32 %v2115, %v2131
    %v2134 = vadd.f32 %v2116, %v2132
    %v2135 = vrcp.pop %v2129
    %v2136 = vrcp.pop %v2130
    %v2137 = vmul.f32 %v2133, %v2135
    %v2138 = vmul.f32 %v2134, %v2136
    %vm2139 = vcmask 130048
    %v2141 = vsel %vm2139, %v40, 0
    %2143 = vmatprep.subr.mxu0 0.0
    %2144 = vmatpush1.msra.mxu0 %v2137
    %2145 = vmatprep.subr.mxu0 0.0
    %2146 = vmatpush1.msra.mxu0 %v2138
    %2147 = vmatprep.subr.mxu0 0.0
    %2148 = vmatpush1.msra.mxu0 0.0
    %2149 = vmatprep.subr.mxu0 0.0
    %2150 = vmatpush1.msra.mxu0 0.0
    %2151 = vmatprep.subr.mxu0 0.0
    %2152 = vmatpush1.msra.mxu0 0.0
    %2153 = vmatprep.subr.mxu0 0.0
    %2154 = vmatpush1.msra.mxu0 0.0
    %2155 = vmatprep.subr.mxu0 0.0
    %2156 = vmatpush1.msra.mxu0 0.0
    %2157 = vmatprep.subr.mxu0 0.0
    %2158 = vmatpush1.msra.mxu0 0.0
    %2159 = vmatprep.subr.mxu0 0.0
    %2160 = vmatpush1.msra.mxu0 0.0
    %2161 = vmatprep.subr.mxu0 0.0
    %2162 = vmatpush1.msra.mxu0 0.0
    %2163 = vmatprep.subr.mxu0 0.0
    %2164 = vmatpush1.msra.mxu0 0.0
    %2165 = vmatprep.subr.mxu0 0.0
    %2166 = vmatpush1.msra.mxu0 0.0
    %2167 = vmatprep.subr.mxu0 0.0
    %2168 = vmatpush1.msra.mxu0 0.0
    %2169 = vmatprep.subr.mxu0 0.0
    %2170 = vmatpush1.msra.mxu0 0.0
    %2171 = vmatprep.subr.mxu0 0.0
    %2172 = vmatpush1.msra.mxu0 0.0
    %2173 = vmatprep.subr.mxu0 0.0
    %2174 = vmatpush1.msra.mxu0 0.0
    %2175 = vmatprep.subr.mxu0 0.0
    %2176 = vmatpush1.msra.mxu0 0.0
    %2177 = vmatprep.subr.mxu0 0.0
    %2178 = vmatpush1.msra.mxu0 0.0
    %2179 = vmatprep.subr.mxu0 0.0
    %2180 = vmatpush1.msra.mxu0 0.0
    %2181 = vmatprep.subr.mxu0 0.0
    %2182 = vmatpush1.msra.mxu0 0.0
    %2183 = vmatprep.subr.mxu0 0.0
    %2184 = vmatpush1.msra.mxu0 0.0
    %2185 = vmatprep.subr.mxu0 0.0
    %2186 = vmatpush1.msra.mxu0 0.0
    %2187 = vmatprep.subr.mxu0 0.0
    %2188 = vmatpush1.msra.mxu0 0.0
    %2189 = vmatprep.subr.mxu0 0.0
    %2190 = vmatpush1.msra.mxu0 0.0
    %2191 = vmatprep.subr.mxu0 0.0
    %2192 = vmatpush1.msra.mxu0 0.0
    %2193 = vmatprep.subr.mxu0 0.0
    %2194 = vmatpush1.msra.mxu0 0.0
    %2195 = vmatprep.subr.mxu0 0.0
    %2196 = vmatpush1.msra.mxu0 0.0
    %2197 = vmatprep.subr.mxu0 0.0
    %2198 = vmatpush1.msra.mxu0 0.0
    %2199 = vmatprep.subr.mxu0 0.0
    %2200 = vmatpush1.msra.mxu0 0.0
    %2201 = vmatprep.subr.mxu0 0.0
    %2202 = vmatpush1.msra.mxu0 0.0
    %2203 = vmatprep.subr.mxu0 0.0
    %2204 = vmatpush1.msra.mxu0 0.0
    %2205 = vmatprep.subr.mxu0 0.0
    %2206 = vmatpush1.msra.mxu0 0.0
    %2207 = vmatprep.mubr.f32.mxu0 0.0
    %2208 = vmatmul.mubr.f32.gmra.mrb[0].mxu0 %v2141
    %v2209 = vpop.f32.mrb[0].mxu0
    %v2210 = vadd.f32 0.0, %v2209
    %v2211 = vpop.f32.mrb[0].mxu0
    %2212 = vdwg.mxu0
    %v2213 = vadd.f32 %v133, %v2210
    %2214 = vst [vmem:[#allocation6] sm:$0x1] %v2213
    // Predicated region
    $region26: #{tpu_custom_call.1} parent=1 // pred_check
      _
    $region27: #{tpu_custom_call.1} parent=1 // pred_check_branch
      %2216 = sbr.rel (0) target = $region29
    $region28: #{tpu_custom_call.1} parent=1 // pred_region
      %s2218 = ssub.s32 16, 16
      %2219 = vsyncadd [#allocation5], %s2218
      %s2221 = sshll.u32 [#allocation6], 4
      %s2222 = int_to_ptr.vmem [resolvable:$true] %s2221
      %2224 = dma.vmem_to_hbm [thread:$0]  %s2222, 16, %s5, [#allocation5]
    $region29: #{tpu_custom_call.1} parent=1 // pred_fallthru
      _
    // Predicated region
    $region30: #{tpu_custom_call.1} parent=1 // pred_check
      _
    $region31: #{tpu_custom_call.1} parent=1 // pred_check_branch
      %2226 = sbr.rel (0) target = $region33
    $region32: #{tpu_custom_call.1} parent=1 // pred_region
      %2227 = dma.done [#allocation5], 16
    $region33: #{tpu_custom_call.1} parent=1 // pred_fallthru
      _
    %2228 = vsyncpa [#allocation4], 1
    %2229 = vsyncpa [#allocation5], 1

</llo_original>
